<compile_context>
chip_gen: v7x
topology: tpu7x:2x2x1
jax: 0.10.0
libtpu: 0.0.40
codegen_flags: <defaults>
</compile_context>

<pallas_src>
import math

import jax
import jax.numpy as jnp
from jax import lax
from jax.experimental import pallas as pl
from jax.experimental.pallas import tpu as pltpu


def _exclusion_kernel(x_ref, gap_ref, w_ref, b_ref, out_ref, hm_ref):
    # x_ref  : (1, C, B*HW)  bf16  — B samples packed along the lane axis
    # gap_ref: (1, B, C)     bf16
    # w_ref  : (K, C)        bf16  — VMEM-resident (constant index_map)
    # b_ref  : (1, K)        f32
    # out_ref: (1, B, K)     f32
    # hm_ref : (1, K, B*HW)  f32
    w = w_ref[...]                                             # (K, C)

    # CAM: hm[k, b*HW + hw] = sum_c W[k, c] * x[c, b*HW + hw]  (lane-dense out)
    hm_ref[0] = jnp.dot(w, x_ref[0], preferred_element_type=jnp.float32)

    # Linear head: contract on C directly — no transpose of w through the XLU.
    logits = lax.dot_general(
        gap_ref[0], w,
        dimension_numbers=(((1,), (1,)), ((), ())),
        preferred_element_type=jnp.float32)                    # (B, K) f32
    out_ref[0] = logits + b_ref[...]                           # f32 bias add


def _pick_batch_block(n, c, hw, itemsize):
    """Samples per grid step: VMEM-safe, >= 2 grid steps, lane-dense B*HW."""
    # x blocks are double-buffered by the pipeline: keep one buffer <= ~4 MiB
    # so 2x fits comfortably in v7x's 64 MiB VMEM as well as v5e/v6e's 128 MiB.
    budget_bytes = 4 * 1024 * 1024
    b = max(1, min(n, budget_bytes // max(1, c * hw * itemsize), 32))
    # Keep at least 2 grid steps so v7x's two TensorCores (and megacore
    # sharding on v5e/v6e) both get work.
    while b > 1 and pl.cdiv(n, b) < 2:
        b -= 1
    # Prefer B*HW to be a multiple of 128 lanes (unmasked vector stores).
    need = 128 // math.gcd(hw, 128)
    while b > 1 and b % need != 0:
        b -= 1
    return b


def exclusion_classifier_forward(x, gap_x, fc_weight, fc_bias,
                                 *, compute_dtype=jnp.bfloat16):
    """x: (N, C, H, W); gap_x: (N, C, 1, 1) or (N, C); fc_weight: (K, C);
    fc_bias: (K,). Returns (out (N, K) f32, hm (N, K, H, W) f32)."""
    N, C, H, W = x.shape
    K = fc_weight.shape[0]
    HW = H * W

    B = _pick_batch_block(N, C, HW, jnp.dtype(compute_dtype).itemsize)
    G = pl.cdiv(N, B)
    Np = G * B

    gap = gap_x.reshape(N, -1)
    if Np != N:                        # pad batch to a multiple of B
        x = jnp.pad(x, ((0, Np - N), (0, 0), (0, 0), (0, 0)))
        gap = jnp.pad(gap, ((0, Np - N), (0, 0)))

    # Lane-dense packing: per block of B samples, x' = (C, B*HW).
    xp = (x.reshape(G, B, C, HW)
            .transpose(0, 2, 1, 3)
            .reshape(G, C, B * HW)
            .astype(compute_dtype))
    gap_p = gap.reshape(G, B, C).astype(compute_dtype)
    w = fc_weight.astype(compute_dtype)                        # (K, C)
    b = fc_bias.reshape(1, K).astype(jnp.float32)              # (1, K)

    out_p, hm_p = pl.pallas_call(
        _exclusion_kernel,
        out_shape=(
            jax.ShapeDtypeStruct((G, B, K), jnp.float32),
            jax.ShapeDtypeStruct((G, K, B * HW), jnp.float32),
        ),
        grid_spec=pltpu.PrefetchScalarGridSpec(
            num_scalar_prefetch=0,
            grid=(G,),
            in_specs=[
                pl.BlockSpec((1, C, B * HW), lambda g: (g, 0, 0)),   # x'
                pl.BlockSpec((1, B, C), lambda g: (g, 0, 0)),        # gap_x
                pl.BlockSpec((K, C), lambda g: (0, 0)),              # fc weight
                pl.BlockSpec((1, K), lambda g: (0, 0)),              # fc bias
            ],
            out_specs=[
                pl.BlockSpec((1, B, K), lambda g: (g, 0, 0)),        # out
                pl.BlockSpec((1, K, B * HW), lambda g: (g, 0, 0)),   # hm
            ],
        ),
        compiler_params=pltpu.CompilerParams(
            dimension_semantics=("parallel",)),
    )(xp, gap_p, w, b)

    out = out_p.reshape(Np, K)[:N]
    hm = (hm_p.reshape(G, K, B, HW)
              .transpose(0, 2, 1, 3)
              .reshape(Np, K, H, W)[:N])
    return out, hm


if __name__ == "__main__":
    # The module fixes nn.Linear(2048, K), so C = 2048.
    N, C, H, W = 4, 2048, 8, 8
    num_classes = 4            # > 1, so self.num_classes == num_classes

    key = jax.random.PRNGKey(0)
    kx, kw, kb = jax.random.split(key, 3)

    x = jax.random.normal(kx, (N, C, H, W), dtype=jnp.float32)
    # gap_x mimics a global-average-pooled feature map (N, C, 1, 1).
    gap_x = jnp.mean(x, axis=(2, 3), keepdims=True)

    fc_weight = jax.random.normal(kw, (num_classes, C), dtype=jnp.float32) * 0.02
    fc_bias = jax.random.normal(kb, (num_classes,), dtype=jnp.float32) * 0.02

    fwd = jax.jit(exclusion_classifier_forward)
    out, hm = jax.block_until_ready(fwd(x, gap_x, fc_weight, fc_bias))

    # Tight reference: same bf16 operand rounding, exact f32 accumulation.
    xb = x.astype(jnp.bfloat16).astype(jnp.float32)
    gb = gap_x.reshape(N, -1).astype(jnp.bfloat16).astype(jnp.float32)
    wb = fc_weight.astype(jnp.bfloat16).astype(jnp.float32)
    out_ref = jnp.dot(gb, wb.T, precision=lax.Precision.HIGHEST) + fc_bias
    hm_ref = jnp.einsum("nchw,kc->nkhw", xb, wb,
                        precision=lax.Precision.HIGHEST)
    assert jnp.allclose(out, out_ref, atol=2e-3, rtol=2e-3)
    assert jnp.allclose(hm, hm_ref, atol=2e-3, rtol=2e-3)

    # Loose sanity check against the pure-f32 reference (bf16 MXU operands).
    out_f32 = jnp.dot(gap_x.reshape(N, -1), fc_weight.T,
                      precision=lax.Precision.HIGHEST) + fc_bias
    hm_f32 = jnp.einsum("nchw,kc->nkhw", x, fc_weight,
                        precision=lax.Precision.HIGHEST)
    assert jnp.allclose(out, out_f32, atol=1e-1, rtol=1e-1)
    assert jnp.allclose(hm, hm_f32, atol=1e-1, rtol=1e-1)

    print("KERNEL_OK")
</pallas_src>

<mosaic_0001>
module attributes {stable_mosaic.version = 11 : i64} {
  func.func @_exclusion_kernel(%arg0: i32, %arg1: memref<1x2048x128xbf16, #tpu.memory_space<vmem>>, %arg2: memref<1x2x2048xbf16, #tpu.memory_space<vmem>>, %arg3: memref<4x2048xbf16, #tpu.memory_space<vmem>>, %arg4: memref<1x4xf32, #tpu.memory_space<vmem>>, %arg5: memref<1x2x4xf32, #tpu.memory_space<vmem>>, %arg6: memref<1x4x128xf32, #tpu.memory_space<vmem>>) attributes {dimension_semantics = [#tpu.dimension_semantics<parallel>], iteration_bounds = array<i64: 2>, scalar_prefetch = 0 : i64, scratch_operands = 0 : i64, tpu.core_type = #tpu.core_type<tc>, window_params = [{transform_indices = @transform_0, window_bounds = array<i64: 1, 2048, 128>}, {transform_indices = @transform_1, window_bounds = array<i64: 1, 2, 2048>}, {pipeline_mode = #tpu.pipeline_mode<synchronous>, transform_indices = @transform_2, window_bounds = array<i64: 4, 2048>}, {pipeline_mode = #tpu.pipeline_mode<synchronous>, transform_indices = @transform_3, window_bounds = array<i64: 1, 4>}, {transform_indices = @transform_4, window_bounds = array<i64: 1, 2, 4>}, {transform_indices = @transform_5, window_bounds = array<i64: 1, 4, 128>}]} {
    %c0 = arith.constant 0 : index
    %c0_0 = arith.constant 0 : index
    %0 = vector.load %arg3[%c0, %c0_0] : memref<4x2048xbf16, #tpu.memory_space<vmem>>, vector<4x2048xbf16>
    %c0_1 = arith.constant 0 : index
    %c0_2 = arith.constant 0 : index
    %c0_3 = arith.constant 0 : index
    %1 = vector.load %arg1[%c0_1, %c0_2, %c0_3] : memref<1x2048x128xbf16, #tpu.memory_space<vmem>>, vector<1x2048x128xbf16>
    %2 = vector.shape_cast %1 : vector<1x2048x128xbf16> to vector<2048x128xbf16>
    %cst = arith.constant dense<0.000000e+00> : vector<4x128xf32>
    %3 = tpu.matmul %0, %2, %cst {dimension_numbers = #tpu.dot_dimension_numbers<[1], [0], [0], [1], [0, 0, 1, 1], [], []>} : vector<4x2048xbf16>, vector<2048x128xbf16>, vector<4x128xf32> -> vector<4x128xf32>
    %c0_4 = arith.constant 0 : index
    %c0_5 = arith.constant 0 : index
    %c0_6 = arith.constant 0 : index
    %4 = vector.load %arg6[%c0_4, %c0_5, %c0_6] : memref<1x4x128xf32, #tpu.memory_space<vmem>>, vector<1x4x128xf32>
    %5 = vector.shape_cast %4 : vector<1x4x128xf32> to vector<4x128xf32>
    %6 = vector.shape_cast %3 : vector<4x128xf32> to vector<1x4x128xf32>
    tpu.vector_store %arg6[%c0_4, %c0_5, %c0_6], %6 {strides = array<i32>} : memref<1x4x128xf32, #tpu.memory_space<vmem>>, vector<1x4x128xf32>,
    %c0_7 = arith.constant 0 : index
    %c0_8 = arith.constant 0 : index
    %c0_9 = arith.constant 0 : index
    %7 = vector.load %arg2[%c0_7, %c0_8, %c0_9] : memref<1x2x2048xbf16, #tpu.memory_space<vmem>>, vector<1x2x2048xbf16>
    %8 = vector.shape_cast %7 : vector<1x2x2048xbf16> to vector<2x2048xbf16>
    %cst_10 = arith.constant dense<0.000000e+00> : vector<2x4xf32>
    %9 = tpu.matmul %8, %0, %cst_10 {dimension_numbers = #tpu.dot_dimension_numbers<[1], [1], [0], [0], [0, 0, 1, 0], [], []>} : vector<2x2048xbf16>, vector<4x2048xbf16>, vector<2x4xf32> -> vector<2x4xf32>
    %c0_11 = arith.constant 0 : index
    %c0_12 = arith.constant 0 : index
    %10 = vector.load %arg4[%c0_11, %c0_12] : memref<1x4xf32, #tpu.memory_space<vmem>>, vector<1x4xf32>
    %11 = vector.broadcast %10 : vector<1x4xf32> to vector<2x4xf32>
    %12 = arith.addf %9, %11 : vector<2x4xf32>
    %c0_13 = arith.constant 0 : index
    %c0_14 = arith.constant 0 : index
    %c0_15 = arith.constant 0 : index
    %13 = vector.load %arg5[%c0_13, %c0_14, %c0_15] : memref<1x2x4xf32, #tpu.memory_space<vmem>>, vector<1x2x4xf32>
    %14 = vector.shape_cast %13 : vector<1x2x4xf32> to vector<2x4xf32>
    %15 = vector.shape_cast %12 : vector<2x4xf32> to vector<1x2x4xf32>
    tpu.vector_store %arg5[%c0_13, %c0_14, %c0_15], %15 {strides = array<i32>} : memref<1x2x4xf32, #tpu.memory_space<vmem>>, vector<1x2x4xf32>,
    return
  }
  func.func @transform_0(%arg0: i32) -> (i32, i32, i32) {
    %c0_i32 = arith.constant 0 : i32
    %c0_i32_0 = arith.constant 0 : i32
    %c0_i32_1 = arith.constant 0 : i32
    return %arg0, %c0_i32, %c0_i32_0 : i32, i32, i32
  }
  func.func @transform_1(%arg0: i32) -> (i32, i32, i32) {
    %c0_i32 = arith.constant 0 : i32
    %c0_i32_0 = arith.constant 0 : i32
    %c0_i32_1 = arith.constant 0 : i32
    return %arg0, %c0_i32, %c0_i32_0 : i32, i32, i32
  }
  func.func @transform_2(%arg0: i32) -> (i32, i32) {
    %c0_i32 = arith.constant 0 : i32
    %c0_i32_0 = arith.constant 0 : i32
    %c0_i32_1 = arith.constant 0 : i32
    return %c0_i32, %c0_i32_0 : i32, i32
  }
  func.func @transform_3(%arg0: i32) -> (i32, i32) {
    %c0_i32 = arith.constant 0 : i32
    %c0_i32_0 = arith.constant 0 : i32
    %c0_i32_1 = arith.constant 0 : i32
    return %c0_i32, %c0_i32_0 : i32, i32
  }
  func.func @transform_4(%arg0: i32) -> (i32, i32, i32) {
    %c0_i32 = arith.constant 0 : i32
    %c0_i32_0 = arith.constant 0 : i32
    %c0_i32_1 = arith.constant 0 : i32
    return %arg0, %c0_i32, %c0_i32_0 : i32, i32, i32
  }
  func.func @transform_5(%arg0: i32) -> (i32, i32, i32) {
    %c0_i32 = arith.constant 0 : i32
    %c0_i32_0 = arith.constant 0 : i32
    %c0_i32_1 = arith.constant 0 : i32
    return %arg0, %c0_i32, %c0_i32_0 : i32, i32, i32
  }
}

</mosaic_0001>

<llo_original>
// kernel: exclusion_classifier_forward.1
$region0: #{exclusion_classifier_forward.1}
  #allocation0 [shape = 'u32[]', space=smem, size = 0x4, offset = 0x4, fixed_abs, tag = 'smem constant byte address 0x4 - core index']
  #allocation1 [shape = 'u32[144,128]{1,0:T(1,128)}', space=vmem, size = 0x12000, scoped, tag = 'internal scratch']
  %s0 = inlined_call_operand.vmem [shape: bf16[2,2048,128], index: 0, kind: input, shape index: {}]
  %s1 = inlined_call_operand.vmem [shape: bf16[2,2,2048], index: 1, kind: input, shape index: {}]
  %s2 = inlined_call_operand.vmem [shape: bf16[4,2048], index: 2, kind: input, shape index: {}]
  %s3 = inlined_call_operand.vmem [shape: f32[1,4], index: 3, kind: input, shape index: {}]
  %s4 = inlined_call_operand.hbm [shape: f32[2,2,4], index: 4, kind: output, shape index: {0}]
  %s5 = inlined_call_operand.vmem [shape: f32[2,4,128], index: 5, kind: output, shape index: {1}]
  %6 = xla_tuple %s4, %s5
  %s7 = sld [smem:[#allocation0]]
  $region57: #{exclusion_classifier_forward.1} parent=0
    _
  %s9 = ssub.s32 1, %s7
  %s10 = scalar_select 0, %s9, %s7
  $region1: #{exclusion_classifier_forward.1} parent=0
    #allocation2 [shape = 'u8[2048]{0}', space=vmem, size = 0x800, scoped, tag = 'output window, operand 0']
    #allocation3 [shape = 's32[2]{0}', space=sflag, size = 0x8, scoped, tag = 'scoped memory for exclusion_classifier_forward.1']
    %11 = vsyncpa [#allocation3], 0
    %s12 = scalar_lea.sflag [#allocation3], 1
    %13 = vsyncpa %s12, 0
    loop: start=0, step=1, limit=4
    $region2: #{exclusion_classifier_forward.1} parent=1 // loop_pre_header
      _
    $region3: #{exclusion_classifier_forward.1} parent=1 // loop_header
      %s15 = sphi 0, %s19
      %p16 = scmp.ge.s32.totalorder %s15, 4
      %s25 = sphi 0, %s27
      %s28 = sphi 0, %s25
      %s29 = sphi 0, %s28
      %s45 = sphi 0, %s29
      %s51 = sphi 0, %s53
      %s54 = sphi 0, %s51
      %s55 = sphi 0, %s54
      %s71 = sphi 0, %s55
      %s75 = sphi 0, %s75
      %s77 = sphi 0, %s75
      %s78 = sphi 0, %s77
      %s92 = sphi 0, %s78
      %s96 = sphi 0, %s96
      %s98 = sphi 0, %s96
      %s99 = sphi 0, %s98
      %s113 = sphi 0, %s99
      %s119 = sphi 0, %s121
      %s122 = sphi 0, %s119
      %s123 = sphi 0, %s122
      %s139 = sphi 0, %s123
      %s145 = sphi 0, %s147
      %s148 = sphi 0, %s145
      %s149 = sphi 0, %s148
      %s165 = sphi 0, %s149
    $region4: #{exclusion_classifier_forward.1} parent=1 // loop_header_branch
      %18 = sbr.rel (%p16) target = $region8
    $region5: #{exclusion_classifier_forward.1} parent=1 // loop_body
      %s20 = ssub.s32 %s15, 1
      %s21 = ssub.s32 %s15, 2
      %s22 = sadd.s32 %s15, 1
      %s23 = ssub.s32 %s15, %s22
      %p24 = scmp.eq.s32.totalorder %s23, 0
      %s26 = sadd.s32 %s25, 1
      %s27 = scalar_select %p24, %s25, %s26
      %p30 = pneg %p24
      %p31 = scmp.eq.s32.totalorder %s15, 1
      %p32 = por %p30, %p31
      %p33 = scmp.ne.s32.totalorder %s25, %s28
      %p34 = scmp.eq.s32.totalorder %s15, 0
      %p35 = por %p33, %p34
      %p36 = scmp.ne.s32.totalorder %s25, %s28
      %p37 = scmp.eq.s32.totalorder %s20, 1
      %p38 = por %p36, %p37
      %p39 = scmp.ne.s32.totalorder %s28, %s29
      %p40 = scmp.eq.s32.totalorder %s20, 0
      %p41 = por %p39, %p40
      %p42 = scmp.ne.s32.totalorder %s28, %s29
      %p43 = scmp.eq.s32.totalorder %s21, 1
      %p44 = por %p42, %p43
      %p46 = scmp.ne.s32.totalorder %s29, %s45
      %p47 = scmp.eq.s32.totalorder %s21, 0
      %p48 = por %p46, %p47
      %s49 = ssub.s32 %s15, %s22
      %p50 = scmp.eq.s32.totalorder %s49, 0
      %s52 = sadd.s32 %s51, 1
      %s53 = scalar_select %p50, %s51, %s52
      %p56 = pneg %p50
      %p57 = scmp.eq.s32.totalorder %s15, 1
      %p58 = por %p56, %p57
      %p59 = scmp.ne.s32.totalorder %s51, %s54
      %p60 = scmp.eq.s32.totalorder %s15, 0
      %p61 = por %p59, %p60
      %p62 = scmp.ne.s32.totalorder %s51, %s54
      %p63 = scmp.eq.s32.totalorder %s20, 1
      %p64 = por %p62, %p63
      %p65 = scmp.ne.s32.totalorder %s54, %s55
      %p66 = scmp.eq.s32.totalorder %s20, 0
      %p67 = por %p65, %p66
      %p68 = scmp.ne.s32.totalorder %s54, %s55
      %p69 = scmp.eq.s32.totalorder %s21, 1
      %p70 = por %p68, %p69
      %p72 = scmp.ne.s32.totalorder %s55, %s71
      %p73 = scmp.eq.s32.totalorder %s21, 0
      %p74 = por %p72, %p73
      %s76 = sadd.s32 %s75, 1
      %p79 = scmp.eq.s32.totalorder %s15, 1
      %p80 = scmp.ne.s32.totalorder %s75, %s77
      %p81 = scmp.eq.s32.totalorder %s15, 0
      %p82 = por %p80, %p81
      %p83 = scmp.ne.s32.totalorder %s75, %s77
      %p84 = scmp.eq.s32.totalorder %s20, 1
      %p85 = por %p83, %p84
      %p86 = scmp.ne.s32.totalorder %s77, %s78
      %p87 = scmp.eq.s32.totalorder %s20, 0
      %p88 = por %p86, %p87
      %p89 = scmp.ne.s32.totalorder %s77, %s78
      %p90 = scmp.eq.s32.totalorder %s21, 1
      %p91 = por %p89, %p90
      %p93 = scmp.ne.s32.totalorder %s78, %s92
      %p94 = scmp.eq.s32.totalorder %s21, 0
      %p95 = por %p93, %p94
      %s97 = sadd.s32 %s96, 1
      %p100 = scmp.eq.s32.totalorder %s15, 1
      %p101 = scmp.ne.s32.totalorder %s96, %s98
      %p102 = scmp.eq.s32.totalorder %s15, 0
      %p103 = por %p101, %p102
      %p104 = scmp.ne.s32.totalorder %s96, %s98
      %p105 = scmp.eq.s32.totalorder %s20, 1
      %p106 = por %p104, %p105
      %p107 = scmp.ne.s32.totalorder %s98, %s99
      %p108 = scmp.eq.s32.totalorder %s20, 0
      %p109 = por %p107, %p108
      %p110 = scmp.ne.s32.totalorder %s98, %s99
      %p111 = scmp.eq.s32.totalorder %s21, 1
      %p112 = por %p110, %p111
      %p114 = scmp.ne.s32.totalorder %s99, %s113
      %p115 = scmp.eq.s32.totalorder %s21, 0
      %p116 = por %p114, %p115
      %s117 = ssub.s32 %s15, %s22
      %p118 = scmp.eq.s32.totalorder %s117, 0
      %s120 = sadd.s32 %s119, 1
      %s121 = scalar_select %p118, %s119, %s120
      %p124 = pneg %p118
      %p125 = scmp.eq.s32.totalorder %s15, 1
      %p126 = por %p124, %p125
      %p127 = scmp.ne.s32.totalorder %s119, %s122
      %p128 = scmp.eq.s32.totalorder %s15, 0
      %p129 = por %p127, %p128
      %p130 = scmp.ne.s32.totalorder %s119, %s122
      %p131 = scmp.eq.s32.totalorder %s20, 1
      %p132 = por %p130, %p131
      %p133 = scmp.ne.s32.totalorder %s122, %s123
      %p134 = scmp.eq.s32.totalorder %s20, 0
      %p135 = por %p133, %p134
      %p136 = scmp.ne.s32.totalorder %s122, %s123
      %p137 = scmp.eq.s32.totalorder %s21, 1
      %p138 = por %p136, %p137
      %p140 = scmp.ne.s32.totalorder %s123, %s139
      %p141 = scmp.eq.s32.totalorder %s21, 0
      %p142 = por %p140, %p141
      %s143 = ssub.s32 %s15, %s22
      %p144 = scmp.eq.s32.totalorder %s143, 0
      %s146 = sadd.s32 %s145, 1
      %s147 = scalar_select %p144, %s145, %s146
      %p150 = pneg %p144
      %p151 = scmp.eq.s32.totalorder %s15, 1
      %p152 = por %p150, %p151
      %p153 = scmp.ne.s32.totalorder %s145, %s148
      %p154 = scmp.eq.s32.totalorder %s15, 0
      %p155 = por %p153, %p154
      %p156 = scmp.ne.s32.totalorder %s145, %s148
      %p157 = scmp.eq.s32.totalorder %s20, 1
      %p158 = por %p156, %p157
      %p159 = scmp.ne.s32.totalorder %s148, %s149
      %p160 = scmp.eq.s32.totalorder %s20, 0
      %p161 = por %p159, %p160
      %p162 = scmp.ne.s32.totalorder %s148, %s149
      %p163 = scmp.eq.s32.totalorder %s21, 1
      %p164 = por %p162, %p163
      %p166 = scmp.ne.s32.totalorder %s149, %s165
      %p167 = scmp.eq.s32.totalorder %s21, 0
      %p168 = por %p166, %p167
      %p169 = scmp.le.s32.totalorder 1, %s15
      %p170 = scmp.lt.s32.totalorder %s15, 3
      %p171 = pnand %p169, %p170
      %p172 = pneg %p171
      // Predicated region
      $region9: #{exclusion_classifier_forward.1} parent=5 // pred_check
        _
      $region10: #{exclusion_classifier_forward.1} parent=5 // pred_check_branch
        %174 = sbr.rel (%p171) target = $region12
      $region11: #{exclusion_classifier_forward.1} parent=5 // pred_region
        %s175 = ssub.s32 %s15, 1
        // Predicated region
        $region13: #{exclusion_classifier_forward.1} parent=11 // pred_check
          %p176 = pneg %p88
        $region14: #{exclusion_classifier_forward.1} parent=11 // pred_check_branch
          %178 = sbr.rel (%p176) target = $region16
        $region15: #{exclusion_classifier_forward.1} parent=11 // pred_region
          _
        $region16: #{exclusion_classifier_forward.1} parent=11 // pred_fallthru
          _
        // Predicated region
        $region17: #{exclusion_classifier_forward.1} parent=11 // pred_check
          %p179 = pneg %p109
        $region18: #{exclusion_classifier_forward.1} parent=11 // pred_check_branch
          %181 = sbr.rel (%p179) target = $region20
        $region19: #{exclusion_classifier_forward.1} parent=11 // pred_region
          _
        $region20: #{exclusion_classifier_forward.1} parent=11 // pred_fallthru
          _
      $region12: #{exclusion_classifier_forward.1} parent=5 // pred_fallthru
        _
      %p182 = scmp.lt.s32.totalorder %s15, 2
      // Predicated region
      $region21: #{exclusion_classifier_forward.1} parent=5 // pred_check
        %p183 = pneg %p182
      $region22: #{exclusion_classifier_forward.1} parent=5 // pred_check_branch
        %185 = sbr.rel (%p183) target = $region24
      $region23: #{exclusion_classifier_forward.1} parent=5 // pred_region
        // Predicated region
        $region25: #{exclusion_classifier_forward.1} parent=23 // pred_check
          %p186 = pneg %p35
        $region26: #{exclusion_classifier_forward.1} parent=23 // pred_check_branch
          %188 = sbr.rel (%p186) target = $region28
        $region27: #{exclusion_classifier_forward.1} parent=23 // pred_region
          %p189 = scmp.lt.s32.totalorder %s15, 1
          %s190 = scalar_select %p189, %s15, 1
          %s191 = smul.addr %s190, 256
          %s192 = smul.addr %s191, 4
          %s193 = scalar_lea.vmem %s0, %s192
        $region28: #{exclusion_classifier_forward.1} parent=23 // pred_fallthru
          _
        // Predicated region
        $region29: #{exclusion_classifier_forward.1} parent=23 // pred_check
          %p194 = pneg %p61
        $region30: #{exclusion_classifier_forward.1} parent=23 // pred_check_branch
          %196 = sbr.rel (%p194) target = $region32
        $region31: #{exclusion_classifier_forward.1} parent=23 // pred_region
          %p197 = scmp.lt.s32.totalorder %s15, 1
          %s198 = scalar_select %p197, %s15, 1
          %s199 = smul.addr %s198, 16
          %s200 = scalar_lea.vmem %s1, %s199
        $region32: #{exclusion_classifier_forward.1} parent=23 // pred_fallthru
          _
      $region24: #{exclusion_classifier_forward.1} parent=5 // pred_fallthru
        _
      %p201 = scmp.le.s32.totalorder 1, %s15
      %p202 = scmp.lt.s32.totalorder %s15, 3
      %p203 = pnand %p201, %p202
      %p204 = pneg %p203
      // Predicated region
      $region33: #{exclusion_classifier_forward.1} parent=5 // pred_check
        _
      $region34: #{exclusion_classifier_forward.1} parent=5 // pred_check_branch
        %206 = sbr.rel (%p203) target = $region36
      $region35: #{exclusion_classifier_forward.1} parent=5 // pred_region
        %s207 = ssub.s32 %s15, 1
        %p208 = scmp.lt.s32.totalorder %s20, 1
        %s209 = scalar_select %p208, %s20, 1
        %s210 = smul.addr %s209, 256
        %s211 = smul.addr %s210, 4
        %s212 = scalar_lea.vmem %s0, %s211
        %p213 = pneg %p41
        %p214 = pneg %p38
        %p215 = scmp.lt.s32.totalorder %s20, 1
        %s216 = scalar_select %p215, %s20, 1
        %s217 = smul.addr %s216, 16
        %s218 = scalar_lea.vmem %s1, %s217
        %p219 = pneg %p67
        %p220 = pneg %p64
        %p221 = pneg %p88
        %p222 = pneg %p85
        %p223 = pneg %p109
        %p224 = pneg %p106
        %p225 = pneg %p135
        %p226 = pneg %p132
        %s227 = sand.u32 %s122, 1
        %s228 = scalar_lea.sflag [#allocation3], %s227
        %s229 = sand.u32 %s122, 1
        %s230 = smul.addr %s229, 2
        %s231 = scalar_lea.vmem [#allocation2], %s230
        %p232 = pneg %p161
        %p233 = pneg %p158
        %p234 = scmp.lt.s32.totalorder %s20, 1
        %s235 = scalar_select %p234, %s20, 1
        %s236 = smul.addr %s235, 4
        %s237 = scalar_lea.vmem %s5, %s236
        %p238 = scmp.lt.s32.totalorder %s20, 1
        %s239 = scalar_select %p238, %s20, 1
        %s240 = smul.addr %s239, 256
        %s241 = smul.addr %s240, 4
        %s242 = scalar_lea.vmem %s0, %s241
        %p243 = scmp.lt.s32.totalorder %s20, 1
        %s244 = scalar_select %p243, %s20, 1
        %s245 = smul.addr %s244, 16
        %s246 = scalar_lea.vmem %s1, %s245
        %p247 = scmp.lt.s32.totalorder %s20, 1
        %s248 = scalar_select %p247, %s20, 1
        %s249 = smul.addr %s248, 4
        %s250 = scalar_lea.vmem %s5, %s249
        %v252 = vld [vmem:[%s2] sm:$0xff]
        %v253 = vld [vmem:[%s2 + $0x8] sm:$0xff]
        %v254 = vld [vmem:[%s2 + $0x10] sm:$0xff]
        %v255 = vld [vmem:[%s2 + $0x18] sm:$0xff]
        %v256 = vld [vmem:[%s242] sm:$0xf]
        %v257 = vld [vmem:[%s242 + $0x4] sm:$0xf]
        %v258 = vld [vmem:[%s242 + $0x8] sm:$0xf]
        %v259 = vld [vmem:[%s242 + $0xc] sm:$0xf]
        %v260 = vld [vmem:[%s242 + $0x10] sm:$0xf]
        %v261 = vld [vmem:[%s242 + $0x14] sm:$0xf]
        %v262 = vld [vmem:[%s242 + $0x18] sm:$0xf]
        %v263 = vld [vmem:[%s242 + $0x1c] sm:$0xf]
        %v264 = vld [vmem:[%s242 + $0x20] sm:$0xf]
        %v265 = vld [vmem:[%s242 + $0x24] sm:$0xf]
        %v266 = vld [vmem:[%s242 + $0x28] sm:$0xf]
        %v267 = vld [vmem:[%s242 + $0x2c] sm:$0xf]
        %v268 = vld [vmem:[%s242 + $0x30] sm:$0xf]
        %v269 = vld [vmem:[%s242 + $0x34] sm:$0xf]
        %v270 = vld [vmem:[%s242 + $0x38] sm:$0xf]
        %v271 = vld [vmem:[%s242 + $0x3c] sm:$0xf]
        %v272 = vld [vmem:[%s242 + $0x40] sm:$0xf]
        %v273 = vld [vmem:[%s242 + $0x44] sm:$0xf]
        %v274 = vld [vmem:[%s242 + $0x48] sm:$0xf]
        %v275 = vld [vmem:[%s242 + $0x4c] sm:$0xf]
        %v276 = vld [vmem:[%s242 + $0x50] sm:$0xf]
        %v277 = vld [vmem:[%s242 + $0x54] sm:$0xf]
        %v278 = vld [vmem:[%s242 + $0x58] sm:$0xf]
        %v279 = vld [vmem:[%s242 + $0x5c] sm:$0xf]
        %v280 = vld [vmem:[%s242 + $0x60] sm:$0xf]
        %v281 = vld [vmem:[%s242 + $0x64] sm:$0xf]
        %v282 = vld [vmem:[%s242 + $0x68] sm:$0xf]
        %v283 = vld [vmem:[%s242 + $0x6c] sm:$0xf]
        %v284 = vld [vmem:[%s242 + $0x70] sm:$0xf]
        %v285 = vld [vmem:[%s242 + $0x74] sm:$0xf]
        %v286 = vld [vmem:[%s242 + $0x78] sm:$0xf]
        %v287 = vld [vmem:[%s242 + $0x7c] sm:$0xf]
        %v288 = vld [vmem:[%s242 + $0x80] sm:$0xf]
        %v289 = vld [vmem:[%s242 + $0x84] sm:$0xf]
        %v290 = vld [vmem:[%s242 + $0x88] sm:$0xf]
        %v291 = vld [vmem:[%s242 + $0x8c] sm:$0xf]
        %v292 = vld [vmem:[%s242 + $0x90] sm:$0xf]
        %v293 = vld [vmem:[%s242 + $0x94] sm:$0xf]
        %v294 = vld [vmem:[%s242 + $0x98] sm:$0xf]
        %v295 = vld [vmem:[%s242 + $0x9c] sm:$0xf]
        %v296 = vld [vmem:[%s242 + $0xa0] sm:$0xf]
        %v297 = vld [vmem:[%s242 + $0xa4] sm:$0xf]
        %v298 = vld [vmem:[%s242 + $0xa8] sm:$0xf]
        %v299 = vld [vmem:[%s242 + $0xac] sm:$0xf]
        %v300 = vld [vmem:[%s242 + $0xb0] sm:$0xf]
        %v301 = vld [vmem:[%s242 + $0xb4] sm:$0xf]
        %v302 = vld [vmem:[%s242 + $0xb8] sm:$0xf]
        %v303 = vld [vmem:[%s242 + $0xbc] sm:$0xf]
        %v304 = vld [vmem:[%s242 + $0xc0] sm:$0xf]
        %v305 = vld [vmem:[%s242 + $0xc4] sm:$0xf]
        %v306 = vld [vmem:[%s242 + $0xc8] sm:$0xf]
        %v307 = vld [vmem:[%s242 + $0xcc] sm:$0xf]
        %v308 = vld [vmem:[%s242 + $0xd0] sm:$0xf]
        %v309 = vld [vmem:[%s242 + $0xd4] sm:$0xf]
        %v310 = vld [vmem:[%s242 + $0xd8] sm:$0xf]
        %v311 = vld [vmem:[%s242 + $0xdc] sm:$0xf]
        %v312 = vld [vmem:[%s242 + $0xe0] sm:$0xf]
        %v313 = vld [vmem:[%s242 + $0xe4] sm:$0xf]
        %v314 = vld [vmem:[%s242 + $0xe8] sm:$0xf]
        %v315 = vld [vmem:[%s242 + $0xec] sm:$0xf]
        %v316 = vld [vmem:[%s242 + $0xf0] sm:$0xf]
        %v317 = vld [vmem:[%s242 + $0xf4] sm:$0xf]
        %v318 = vld [vmem:[%s242 + $0xf8] sm:$0xf]
        %v319 = vld [vmem:[%s242 + $0xfc] sm:$0xf]
        %v320 = vld [vmem:[%s242 + $0x100] sm:$0xf]
        %v321 = vld [vmem:[%s242 + $0x104] sm:$0xf]
        %v322 = vld [vmem:[%s242 + $0x108] sm:$0xf]
        %v323 = vld [vmem:[%s242 + $0x10c] sm:$0xf]
        %v324 = vld [vmem:[%s242 + $0x110] sm:$0xf]
        %v325 = vld [vmem:[%s242 + $0x114] sm:$0xf]
        %v326 = vld [vmem:[%s242 + $0x118] sm:$0xf]
        %v327 = vld [vmem:[%s242 + $0x11c] sm:$0xf]
        %v328 = vld [vmem:[%s242 + $0x120] sm:$0xf]
        %v329 = vld [vmem:[%s242 + $0x124] sm:$0xf]
        %v330 = vld [vmem:[%s242 + $0x128] sm:$0xf]
        %v331 = vld [vmem:[%s242 + $0x12c] sm:$0xf]
        %v332 = vld [vmem:[%s242 + $0x130] sm:$0xf]
        %v333 = vld [vmem:[%s242 + $0x134] sm:$0xf]
        %v334 = vld [vmem:[%s242 + $0x138] sm:$0xf]
        %v335 = vld [vmem:[%s242 + $0x13c] sm:$0xf]
        %v336 = vld [vmem:[%s242 + $0x140] sm:$0xf]
        %v337 = vld [vmem:[%s242 + $0x144] sm:$0xf]
        %v338 = vld [vmem:[%s242 + $0x148] sm:$0xf]
        %v339 = vld [vmem:[%s242 + $0x14c] sm:$0xf]
        %v340 = vld [vmem:[%s242 + $0x150] sm:$0xf]
        %v341 = vld [vmem:[%s242 + $0x154] sm:$0xf]
        %v342 = vld [vmem:[%s242 + $0x158] sm:$0xf]
        %v343 = vld [vmem:[%s242 + $0x15c] sm:$0xf]
        %v344 = vld [vmem:[%s242 + $0x160] sm:$0xf]
        %v345 = vld [vmem:[%s242 + $0x164] sm:$0xf]
        %v346 = vld [vmem:[%s242 + $0x168] sm:$0xf]
        %v347 = vld [vmem:[%s242 + $0x16c] sm:$0xf]
        %v348 = vld [vmem:[%s242 + $0x170] sm:$0xf]
        %v349 = vld [vmem:[%s242 + $0x174] sm:$0xf]
        %v350 = vld [vmem:[%s242 + $0x178] sm:$0xf]
        %v351 = vld [vmem:[%s242 + $0x17c] sm:$0xf]
        %v352 = vld [vmem:[%s242 + $0x180] sm:$0xf]
        %v353 = vld [vmem:[%s242 + $0x184] sm:$0xf]
        %v354 = vld [vmem:[%s242 + $0x188] sm:$0xf]
        %v355 = vld [vmem:[%s242 + $0x18c] sm:$0xf]
        %v356 = vld [vmem:[%s242 + $0x190] sm:$0xf]
        %v357 = vld [vmem:[%s242 + $0x194] sm:$0xf]
        %v358 = vld [vmem:[%s242 + $0x198] sm:$0xf]
        %v359 = vld [vmem:[%s242 + $0x19c] sm:$0xf]
        %v360 = vld [vmem:[%s242 + $0x1a0] sm:$0xf]
        %v361 = vld [vmem:[%s242 + $0x1a4] sm:$0xf]
        %v362 = vld [vmem:[%s242 + $0x1a8] sm:$0xf]
        %v363 = vld [vmem:[%s242 + $0x1ac] sm:$0xf]
        %v364 = vld [vmem:[%s242 + $0x1b0] sm:$0xf]
        %v365 = vld [vmem:[%s242 + $0x1b4] sm:$0xf]
        %v366 = vld [vmem:[%s242 + $0x1b8] sm:$0xf]
        %v367 = vld [vmem:[%s242 + $0x1bc] sm:$0xf]
        %v368 = vld [vmem:[%s242 + $0x1c0] sm:$0xf]
        %v369 = vld [vmem:[%s242 + $0x1c4] sm:$0xf]
        %v370 = vld [vmem:[%s242 + $0x1c8] sm:$0xf]
        %v371 = vld [vmem:[%s242 + $0x1cc] sm:$0xf]
        %v372 = vld [vmem:[%s242 + $0x1d0] sm:$0xf]
        %v373 = vld [vmem:[%s242 + $0x1d4] sm:$0xf]
        %v374 = vld [vmem:[%s242 + $0x1d8] sm:$0xf]
        %v375 = vld [vmem:[%s242 + $0x1dc] sm:$0xf]
        %v376 = vld [vmem:[%s242 + $0x1e0] sm:$0xf]
        %v377 = vld [vmem:[%s242 + $0x1e4] sm:$0xf]
        %v378 = vld [vmem:[%s242 + $0x1e8] sm:$0xf]
        %v379 = vld [vmem:[%s242 + $0x1ec] sm:$0xf]
        %v380 = vld [vmem:[%s242 + $0x1f0] sm:$0xf]
        %v381 = vld [vmem:[%s242 + $0x1f4] sm:$0xf]
        %v382 = vld [vmem:[%s242 + $0x1f8] sm:$0xf]
        %v383 = vld [vmem:[%s242 + $0x1fc] sm:$0xf]
        %v384 = vld [vmem:[%s242 + $0x200] sm:$0xf]
        %v385 = vld [vmem:[%s242 + $0x204] sm:$0xf]
        %v386 = vld [vmem:[%s242 + $0x208] sm:$0xf]
        %v387 = vld [vmem:[%s242 + $0x20c] sm:$0xf]
        %v388 = vld [vmem:[%s242 + $0x210] sm:$0xf]
        %v389 = vld [vmem:[%s242 + $0x214] sm:$0xf]
        %v390 = vld [vmem:[%s242 + $0x218] sm:$0xf]
        %v391 = vld [vmem:[%s242 + $0x21c] sm:$0xf]
        %v392 = vld [vmem:[%s242 + $0x220] sm:$0xf]
        %v393 = vld [vmem:[%s242 + $0x224] sm:$0xf]
        %v394 = vld [vmem:[%s242 + $0x228] sm:$0xf]
        %v395 = vld [vmem:[%s242 + $0x22c] sm:$0xf]
        %v396 = vld [vmem:[%s242 + $0x230] sm:$0xf]
        %v397 = vld [vmem:[%s242 + $0x234] sm:$0xf]
        %v398 = vld [vmem:[%s242 + $0x238] sm:$0xf]
        %v399 = vld [vmem:[%s242 + $0x23c] sm:$0xf]
        %v400 = vld [vmem:[%s242 + $0x240] sm:$0xf]
        %v401 = vld [vmem:[%s242 + $0x244] sm:$0xf]
        %v402 = vld [vmem:[%s242 + $0x248] sm:$0xf]
        %v403 = vld [vmem:[%s242 + $0x24c] sm:$0xf]
        %v404 = vld [vmem:[%s242 + $0x250] sm:$0xf]
        %v405 = vld [vmem:[%s242 + $0x254] sm:$0xf]
        %v406 = vld [vmem:[%s242 + $0x258] sm:$0xf]
        %v407 = vld [vmem:[%s242 + $0x25c] sm:$0xf]
        %v408 = vld [vmem:[%s242 + $0x260] sm:$0xf]
        %v409 = vld [vmem:[%s242 + $0x264] sm:$0xf]
        %v410 = vld [vmem:[%s242 + $0x268] sm:$0xf]
        %v411 = vld [vmem:[%s242 + $0x26c] sm:$0xf]
        %v412 = vld [vmem:[%s242 + $0x270] sm:$0xf]
        %v413 = vld [vmem:[%s242 + $0x274] sm:$0xf]
        %v414 = vld [vmem:[%s242 + $0x278] sm:$0xf]
        %v415 = vld [vmem:[%s242 + $0x27c] sm:$0xf]
        %v416 = vld [vmem:[%s242 + $0x280] sm:$0xf]
        %v417 = vld [vmem:[%s242 + $0x284] sm:$0xf]
        %v418 = vld [vmem:[%s242 + $0x288] sm:$0xf]
        %v419 = vld [vmem:[%s242 + $0x28c] sm:$0xf]
        %v420 = vld [vmem:[%s242 + $0x290] sm:$0xf]
        %v421 = vld [vmem:[%s242 + $0x294] sm:$0xf]
        %v422 = vld [vmem:[%s242 + $0x298] sm:$0xf]
        %v423 = vld [vmem:[%s242 + $0x29c] sm:$0xf]
        %v424 = vld [vmem:[%s242 + $0x2a0] sm:$0xf]
        %v425 = vld [vmem:[%s242 + $0x2a4] sm:$0xf]
        %v426 = vld [vmem:[%s242 + $0x2a8] sm:$0xf]
        %v427 = vld [vmem:[%s242 + $0x2ac] sm:$0xf]
        %v428 = vld [vmem:[%s242 + $0x2b0] sm:$0xf]
        %v429 = vld [vmem:[%s242 + $0x2b4] sm:$0xf]
        %v430 = vld [vmem:[%s242 + $0x2b8] sm:$0xf]
        %v431 = vld [vmem:[%s242 + $0x2bc] sm:$0xf]
        %v432 = vld [vmem:[%s242 + $0x2c0] sm:$0xf]
        %v433 = vld [vmem:[%s242 + $0x2c4] sm:$0xf]
        %v434 = vld [vmem:[%s242 + $0x2c8] sm:$0xf]
        %v435 = vld [vmem:[%s242 + $0x2cc] sm:$0xf]
        %v436 = vld [vmem:[%s242 + $0x2d0] sm:$0xf]
        %v437 = vld [vmem:[%s242 + $0x2d4] sm:$0xf]
        %v438 = vld [vmem:[%s242 + $0x2d8] sm:$0xf]
        %v439 = vld [vmem:[%s242 + $0x2dc] sm:$0xf]
        %v440 = vld [vmem:[%s242 + $0x2e0] sm:$0xf]
        %v441 = vld [vmem:[%s242 + $0x2e4] sm:$0xf]
        %v442 = vld [vmem:[%s242 + $0x2e8] sm:$0xf]
        %v443 = vld [vmem:[%s242 + $0x2ec] sm:$0xf]
        %v444 = vld [vmem:[%s242 + $0x2f0] sm:$0xf]
        %v445 = vld [vmem:[%s242 + $0x2f4] sm:$0xf]
        %v446 = vld [vmem:[%s242 + $0x2f8] sm:$0xf]
        %v447 = vld [vmem:[%s242 + $0x2fc] sm:$0xf]
        %v448 = vld [vmem:[%s242 + $0x300] sm:$0xf]
        %v449 = vld [vmem:[%s242 + $0x304] sm:$0xf]
        %v450 = vld [vmem:[%s242 + $0x308] sm:$0xf]
        %v451 = vld [vmem:[%s242 + $0x30c] sm:$0xf]
        %v452 = vld [vmem:[%s242 + $0x310] sm:$0xf]
        %v453 = vld [vmem:[%s242 + $0x314] sm:$0xf]
        %v454 = vld [vmem:[%s242 + $0x318] sm:$0xf]
        %v455 = vld [vmem:[%s242 + $0x31c] sm:$0xf]
        %v456 = vld [vmem:[%s242 + $0x320] sm:$0xf]
        %v457 = vld [vmem:[%s242 + $0x324] sm:$0xf]
        %v458 = vld [vmem:[%s242 + $0x328] sm:$0xf]
        %v459 = vld [vmem:[%s242 + $0x32c] sm:$0xf]
        %v460 = vld [vmem:[%s242 + $0x330] sm:$0xf]
        %v461 = vld [vmem:[%s242 + $0x334] sm:$0xf]
        %v462 = vld [vmem:[%s242 + $0x338] sm:$0xf]
        %v463 = vld [vmem:[%s242 + $0x33c] sm:$0xf]
        %v464 = vld [vmem:[%s242 + $0x340] sm:$0xf]
        %v465 = vld [vmem:[%s242 + $0x344] sm:$0xf]
        %v466 = vld [vmem:[%s242 + $0x348] sm:$0xf]
        %v467 = vld [vmem:[%s242 + $0x34c] sm:$0xf]
        %v468 = vld [vmem:[%s242 + $0x350] sm:$0xf]
        %v469 = vld [vmem:[%s242 + $0x354] sm:$0xf]
        %v470 = vld [vmem:[%s242 + $0x358] sm:$0xf]
        %v471 = vld [vmem:[%s242 + $0x35c] sm:$0xf]
        %v472 = vld [vmem:[%s242 + $0x360] sm:$0xf]
        %v473 = vld [vmem:[%s242 + $0x364] sm:$0xf]
        %v474 = vld [vmem:[%s242 + $0x368] sm:$0xf]
        %v475 = vld [vmem:[%s242 + $0x36c] sm:$0xf]
        %v476 = vld [vmem:[%s242 + $0x370] sm:$0xf]
        %v477 = vld [vmem:[%s242 + $0x374] sm:$0xf]
        %v478 = vld [vmem:[%s242 + $0x378] sm:$0xf]
        %v479 = vld [vmem:[%s242 + $0x37c] sm:$0xf]
        %v480 = vld [vmem:[%s242 + $0x380] sm:$0xf]
        %v481 = vld [vmem:[%s242 + $0x384] sm:$0xf]
        %v482 = vld [vmem:[%s242 + $0x388] sm:$0xf]
        %v483 = vld [vmem:[%s242 + $0x38c] sm:$0xf]
        %v484 = vld [vmem:[%s242 + $0x390] sm:$0xf]
        %v485 = vld [vmem:[%s242 + $0x394] sm:$0xf]
        %v486 = vld [vmem:[%s242 + $0x398] sm:$0xf]
        %v487 = vld [vmem:[%s242 + $0x39c] sm:$0xf]
        %v488 = vld [vmem:[%s242 + $0x3a0] sm:$0xf]
        %v489 = vld [vmem:[%s242 + $0x3a4] sm:$0xf]
        %v490 = vld [vmem:[%s242 + $0x3a8] sm:$0xf]
        %v491 = vld [vmem:[%s242 + $0x3ac] sm:$0xf]
        %v492 = vld [vmem:[%s242 + $0x3b0] sm:$0xf]
        %v493 = vld [vmem:[%s242 + $0x3b4] sm:$0xf]
        %v494 = vld [vmem:[%s242 + $0x3b8] sm:$0xf]
        %v495 = vld [vmem:[%s242 + $0x3bc] sm:$0xf]
        %v496 = vld [vmem:[%s242 + $0x3c0] sm:$0xf]
        %v497 = vld [vmem:[%s242 + $0x3c4] sm:$0xf]
        %v498 = vld [vmem:[%s242 + $0x3c8] sm:$0xf]
        %v499 = vld [vmem:[%s242 + $0x3cc] sm:$0xf]
        %v500 = vld [vmem:[%s242 + $0x3d0] sm:$0xf]
        %v501 = vld [vmem:[%s242 + $0x3d4] sm:$0xf]
        %v502 = vld [vmem:[%s242 + $0x3d8] sm:$0xf]
        %v503 = vld [vmem:[%s242 + $0x3dc] sm:$0xf]
        %v504 = vld [vmem:[%s242 + $0x3e0] sm:$0xf]
        %v505 = vld [vmem:[%s242 + $0x3e4] sm:$0xf]
        %v506 = vld [vmem:[%s242 + $0x3e8] sm:$0xf]
        %v507 = vld [vmem:[%s242 + $0x3ec] sm:$0xf]
        %v508 = vld [vmem:[%s242 + $0x3f0] sm:$0xf]
        %v509 = vld [vmem:[%s242 + $0x3f4] sm:$0xf]
        %v510 = vld [vmem:[%s242 + $0x3f8] sm:$0xf]
        %v511 = vld [vmem:[%s242 + $0x3fc] sm:$0xf]
        %v516 = vcombine.high %v252, %v252
        %v518 = vunpack.c.l.s4 1983009808
        %v519 = vunpack.c.0.s8 %v518
        %v520 = vlaneseq
        %v521 = vshrl.u32 %v520, 7
        %v522 = vsub.s32 %v519, %v521
        %v523 = vrot.slane %v252, %v522
        %v525 = vunpack.c.l.s4 1983009808
        %v526 = vunpack.c.0.s8 %v525
        %v527 = vlaneseq
        %v528 = vshrl.u32 %v527, 7
        %v529 = vsub.s32 %v526, %v528
        %v530 = vrot.slane %v516, %v529
        %v531 = vcombine.high %v523, %v523
        %v532 = vcombine.high %v530, %v530
        %v533 = vcombine.high %v253, %v253
        %v535 = vunpack.c.l.s4 1983009808
        %v536 = vunpack.c.0.s8 %v535
        %v537 = vlaneseq
        %v538 = vshrl.u32 %v537, 7
        %v539 = vsub.s32 %v536, %v538
        %v540 = vrot.slane %v253, %v539
        %v542 = vunpack.c.l.s4 1983009808
        %v543 = vunpack.c.0.s8 %v542
        %v544 = vlaneseq
        %v545 = vshrl.u32 %v544, 7
        %v546 = vsub.s32 %v543, %v545
        %v547 = vrot.slane %v533, %v546
        %v548 = vcombine.high %v540, %v540
        %v549 = vcombine.high %v547, %v547
        %v550 = vcombine.high %v254, %v254
        %v552 = vunpack.c.l.s4 1983009808
        %v553 = vunpack.c.0.s8 %v552
        %v554 = vlaneseq
        %v555 = vshrl.u32 %v554, 7
        %v556 = vsub.s32 %v553, %v555
        %v557 = vrot.slane %v254, %v556
        %v559 = vunpack.c.l.s4 1983009808
        %v560 = vunpack.c.0.s8 %v559
        %v561 = vlaneseq
        %v562 = vshrl.u32 %v561, 7
        %v563 = vsub.s32 %v560, %v562
        %v564 = vrot.slane %v550, %v563
        %v565 = vcombine.high %v557, %v557
        %v566 = vcombine.high %v564, %v564
        %v567 = vcombine.high %v255, %v255
        %v569 = vunpack.c.l.s4 1983009808
        %v570 = vunpack.c.0.s8 %v569
        %v571 = vlaneseq
        %v572 = vshrl.u32 %v571, 7
        %v573 = vsub.s32 %v570, %v572
        %v574 = vrot.slane %v255, %v573
        %v576 = vunpack.c.l.s4 1983009808
        %v577 = vunpack.c.0.s8 %v576
        %v578 = vlaneseq
        %v579 = vshrl.u32 %v578, 7
        %v580 = vsub.s32 %v577, %v579
        %v581 = vrot.slane %v567, %v580
        %v582 = vcombine.high %v574, %v574
        %v583 = vcombine.high %v581, %v581
        %v856 = vunpack.c.l.b16 %v256
        %v857 = vunpack.c.l.b16 %v257
        %v858 = vunpack.c.l.b16 %v258
        %v859 = vunpack.c.l.b16 %v259
        %v860 = vunpack.c.l.b16 %v260
        %v861 = vunpack.c.l.b16 %v261
        %v862 = vunpack.c.l.b16 %v262
        %v863 = vunpack.c.l.b16 %v263
        %v864 = vunpack.c.l.b16 %v264
        %v865 = vunpack.c.l.b16 %v265
        %v866 = vunpack.c.l.b16 %v266
        %v867 = vunpack.c.l.b16 %v267
        %v868 = vunpack.c.l.b16 %v268
        %v869 = vunpack.c.l.b16 %v269
        %v870 = vunpack.c.l.b16 %v270
        %v871 = vunpack.c.l.b16 %v271
        %v872 = vunpack.c.l.b16 %v272
        %v873 = vunpack.c.l.b16 %v273
        %v874 = vunpack.c.l.b16 %v274
        %v875 = vunpack.c.l.b16 %v275
        %v876 = vunpack.c.l.b16 %v276
        %v877 = vunpack.c.l.b16 %v277
        %v878 = vunpack.c.l.b16 %v278
        %v879 = vunpack.c.l.b16 %v279
        %v880 = vunpack.c.l.b16 %v280
        %v881 = vunpack.c.l.b16 %v281
        %v882 = vunpack.c.l.b16 %v282
        %v883 = vunpack.c.l.b16 %v283
        %v884 = vunpack.c.l.b16 %v284
        %v885 = vunpack.c.l.b16 %v285
        %v886 = vunpack.c.l.b16 %v286
        %v887 = vunpack.c.l.b16 %v287
        %v888 = vunpack.c.l.b16 %v288
        %v889 = vunpack.c.l.b16 %v289
        %v890 = vunpack.c.l.b16 %v290
        %v891 = vunpack.c.l.b16 %v291
        %v892 = vunpack.c.l.b16 %v292
        %v893 = vunpack.c.l.b16 %v293
        %v894 = vunpack.c.l.b16 %v294
        %v895 = vunpack.c.l.b16 %v295
        %v896 = vunpack.c.l.b16 %v296
        %v897 = vunpack.c.l.b16 %v297
        %v898 = vunpack.c.l.b16 %v298
        %v899 = vunpack.c.l.b16 %v299
        %v900 = vunpack.c.l.b16 %v300
        %v901 = vunpack.c.l.b16 %v301
        %v902 = vunpack.c.l.b16 %v302
        %v903 = vunpack.c.l.b16 %v303
        %v904 = vunpack.c.l.b16 %v304
        %v905 = vunpack.c.l.b16 %v305
        %v906 = vunpack.c.l.b16 %v306
        %v907 = vunpack.c.l.b16 %v307
        %v908 = vunpack.c.l.b16 %v308
        %v909 = vunpack.c.l.b16 %v309
        %v910 = vunpack.c.l.b16 %v310
        %v911 = vunpack.c.l.b16 %v311
        %v912 = vunpack.c.l.b16 %v312
        %v913 = vunpack.c.l.b16 %v313
        %v914 = vunpack.c.l.b16 %v314
        %v915 = vunpack.c.l.b16 %v315
        %v916 = vunpack.c.l.b16 %v316
        %v917 = vunpack.c.l.b16 %v317
        %v918 = vunpack.c.l.b16 %v318
        %v919 = vunpack.c.l.b16 %v319
        %v920 = vunpack.c.l.b16 %v320
        %v921 = vunpack.c.l.b16 %v321
        %v922 = vunpack.c.l.b16 %v322
        %v923 = vunpack.c.l.b16 %v323
        %v924 = vunpack.c.l.b16 %v324
        %v925 = vunpack.c.l.b16 %v325
        %v926 = vunpack.c.l.b16 %v326
        %v927 = vunpack.c.l.b16 %v327
        %v928 = vunpack.c.l.b16 %v328
        %v929 = vunpack.c.l.b16 %v329
        %v930 = vunpack.c.l.b16 %v330
        %v931 = vunpack.c.l.b16 %v331
        %v932 = vunpack.c.l.b16 %v332
        %v933 = vunpack.c.l.b16 %v333
        %v934 = vunpack.c.l.b16 %v334
        %v935 = vunpack.c.l.b16 %v335
        %v936 = vunpack.c.l.b16 %v336
        %v937 = vunpack.c.l.b16 %v337
        %v938 = vunpack.c.l.b16 %v338
        %v939 = vunpack.c.l.b16 %v339
        %v940 = vunpack.c.l.b16 %v340
        %v941 = vunpack.c.l.b16 %v341
        %v942 = vunpack.c.l.b16 %v342
        %v943 = vunpack.c.l.b16 %v343
        %v944 = vunpack.c.l.b16 %v344
        %v945 = vunpack.c.l.b16 %v345
        %v946 = vunpack.c.l.b16 %v346
        %v947 = vunpack.c.l.b16 %v347
        %v948 = vunpack.c.l.b16 %v348
        %v949 = vunpack.c.l.b16 %v349
        %v950 = vunpack.c.l.b16 %v350
        %v951 = vunpack.c.l.b16 %v351
        %v952 = vunpack.c.l.b16 %v352
        %v953 = vunpack.c.l.b16 %v353
        %v954 = vunpack.c.l.b16 %v354
        %v955 = vunpack.c.l.b16 %v355
        %v956 = vunpack.c.l.b16 %v356
        %v957 = vunpack.c.l.b16 %v357
        %v958 = vunpack.c.l.b16 %v358
        %v959 = vunpack.c.l.b16 %v359
        %v960 = vunpack.c.l.b16 %v360
        %v961 = vunpack.c.l.b16 %v361
        %v962 = vunpack.c.l.b16 %v362
        %v963 = vunpack.c.l.b16 %v363
        %v964 = vunpack.c.l.b16 %v364
        %v965 = vunpack.c.l.b16 %v365
        %v966 = vunpack.c.l.b16 %v366
        %v967 = vunpack.c.l.b16 %v367
        %v968 = vunpack.c.l.b16 %v368
        %v969 = vunpack.c.l.b16 %v369
        %v970 = vunpack.c.l.b16 %v370
        %v971 = vunpack.c.l.b16 %v371
        %v972 = vunpack.c.l.b16 %v372
        %v973 = vunpack.c.l.b16 %v373
        %v974 = vunpack.c.l.b16 %v374
        %v975 = vunpack.c.l.b16 %v375
        %v976 = vunpack.c.l.b16 %v376
        %v977 = vunpack.c.l.b16 %v377
        %v978 = vunpack.c.l.b16 %v378
        %v979 = vunpack.c.l.b16 %v379
        %v980 = vunpack.c.l.b16 %v380
        %v981 = vunpack.c.l.b16 %v381
        %v982 = vunpack.c.l.b16 %v382
        %v983 = vunpack.c.l.b16 %v383
        %v984 = vunpack.c.l.b16 %v384
        %v985 = vunpack.c.l.b16 %v385
        %v986 = vunpack.c.l.b16 %v386
        %v987 = vunpack.c.l.b16 %v387
        %v988 = vunpack.c.l.b16 %v388
        %v989 = vunpack.c.l.b16 %v389
        %v990 = vunpack.c.l.b16 %v390
        %v991 = vunpack.c.l.b16 %v391
        %v992 = vunpack.c.l.b16 %v392
        %v993 = vunpack.c.l.b16 %v393
        %v994 = vunpack.c.l.b16 %v394
        %v995 = vunpack.c.l.b16 %v395
        %v996 = vunpack.c.l.b16 %v396
        %v997 = vunpack.c.l.b16 %v397
        %v998 = vunpack.c.l.b16 %v398
        %v999 = vunpack.c.l.b16 %v399
        %v1000 = vunpack.c.l.b16 %v400
        %v1001 = vunpack.c.l.b16 %v401
        %v1002 = vunpack.c.l.b16 %v402
        %v1003 = vunpack.c.l.b16 %v403
        %v1004 = vunpack.c.l.b16 %v404
        %v1005 = vunpack.c.l.b16 %v405
        %v1006 = vunpack.c.l.b16 %v406
        %v1007 = vunpack.c.l.b16 %v407
        %v1008 = vunpack.c.l.b16 %v408
        %v1009 = vunpack.c.l.b16 %v409
        %v1010 = vunpack.c.l.b16 %v410
        %v1011 = vunpack.c.l.b16 %v411
        %v1012 = vunpack.c.l.b16 %v412
        %v1013 = vunpack.c.l.b16 %v413
        %v1014 = vunpack.c.l.b16 %v414
        %v1015 = vunpack.c.l.b16 %v415
        %v1016 = vunpack.c.l.b16 %v416
        %v1017 = vunpack.c.l.b16 %v417
        %v1018 = vunpack.c.l.b16 %v418
        %v1019 = vunpack.c.l.b16 %v419
        %v1020 = vunpack.c.l.b16 %v420
        %v1021 = vunpack.c.l.b16 %v421
        %v1022 = vunpack.c.l.b16 %v422
        %v1023 = vunpack.c.l.b16 %v423
        %v1024 = vunpack.c.l.b16 %v424
        %v1025 = vunpack.c.l.b16 %v425
        %v1026 = vunpack.c.l.b16 %v426
        %v1027 = vunpack.c.l.b16 %v427
        %v1028 = vunpack.c.l.b16 %v428
        %v1029 = vunpack.c.l.b16 %v429
        %v1030 = vunpack.c.l.b16 %v430
        %v1031 = vunpack.c.l.b16 %v431
        %v1032 = vunpack.c.l.b16 %v432
        %v1033 = vunpack.c.l.b16 %v433
        %v1034 = vunpack.c.l.b16 %v434
        %v1035 = vunpack.c.l.b16 %v435
        %v1036 = vunpack.c.l.b16 %v436
        %v1037 = vunpack.c.l.b16 %v437
        %v1038 = vunpack.c.l.b16 %v438
        %v1039 = vunpack.c.l.b16 %v439
        %v1040 = vunpack.c.l.b16 %v440
        %v1041 = vunpack.c.l.b16 %v441
        %v1042 = vunpack.c.l.b16 %v442
        %v1043 = vunpack.c.l.b16 %v443
        %v1044 = vunpack.c.l.b16 %v444
        %v1045 = vunpack.c.l.b16 %v445
        %v1046 = vunpack.c.l.b16 %v446
        %v1047 = vunpack.c.l.b16 %v447
        %v1048 = vunpack.c.l.b16 %v448
        %v1049 = vunpack.c.l.b16 %v449
        %v1050 = vunpack.c.l.b16 %v450
        %v1051 = vunpack.c.l.b16 %v451
        %v1052 = vunpack.c.l.b16 %v452
        %v1053 = vunpack.c.l.b16 %v453
        %v1054 = vunpack.c.l.b16 %v454
        %v1055 = vunpack.c.l.b16 %v455
        %v1056 = vunpack.c.l.b16 %v456
        %v1057 = vunpack.c.l.b16 %v457
        %v1058 = vunpack.c.l.b16 %v458
        %v1059 = vunpack.c.l.b16 %v459
        %v1060 = vunpack.c.l.b16 %v460
        %v1061 = vunpack.c.l.b16 %v461
        %v1062 = vunpack.c.l.b16 %v462
        %v1063 = vunpack.c.l.b16 %v463
        %v1064 = vunpack.c.l.b16 %v464
        %v1065 = vunpack.c.l.b16 %v465
        %v1066 = vunpack.c.l.b16 %v466
        %v1067 = vunpack.c.l.b16 %v467
        %v1068 = vunpack.c.l.b16 %v468
        %v1069 = vunpack.c.l.b16 %v469
        %v1070 = vunpack.c.l.b16 %v470
        %v1071 = vunpack.c.l.b16 %v471
        %v1072 = vunpack.c.l.b16 %v472
        %v1073 = vunpack.c.l.b16 %v473
        %v1074 = vunpack.c.l.b16 %v474
        %v1075 = vunpack.c.l.b16 %v475
        %v1076 = vunpack.c.l.b16 %v476
        %v1077 = vunpack.c.l.b16 %v477
        %v1078 = vunpack.c.l.b16 %v478
        %v1079 = vunpack.c.l.b16 %v479
        %v1080 = vunpack.c.l.b16 %v480
        %v1081 = vunpack.c.l.b16 %v481
        %v1082 = vunpack.c.l.b16 %v482
        %v1083 = vunpack.c.l.b16 %v483
        %v1084 = vunpack.c.l.b16 %v484
        %v1085 = vunpack.c.l.b16 %v485
        %v1086 = vunpack.c.l.b16 %v486
        %v1087 = vunpack.c.l.b16 %v487
        %v1088 = vunpack.c.l.b16 %v488
        %v1089 = vunpack.c.l.b16 %v489
        %v1090 = vunpack.c.l.b16 %v490
        %v1091 = vunpack.c.l.b16 %v491
        %v1092 = vunpack.c.l.b16 %v492
        %v1093 = vunpack.c.l.b16 %v493
        %v1094 = vunpack.c.l.b16 %v494
        %v1095 = vunpack.c.l.b16 %v495
        %v1096 = vunpack.c.l.b16 %v496
        %v1097 = vunpack.c.l.b16 %v497
        %v1098 = vunpack.c.l.b16 %v498
        %v1099 = vunpack.c.l.b16 %v499
        %v1100 = vunpack.c.l.b16 %v500
        %v1101 = vunpack.c.l.b16 %v501
        %v1102 = vunpack.c.l.b16 %v502
        %v1103 = vunpack.c.l.b16 %v503
        %v1104 = vunpack.c.l.b16 %v504
        %v1105 = vunpack.c.l.b16 %v505
        %v1106 = vunpack.c.l.b16 %v506
        %v1107 = vunpack.c.l.b16 %v507
        %v1108 = vunpack.c.l.b16 %v508
        %v1109 = vunpack.c.l.b16 %v509
        %v1110 = vunpack.c.l.b16 %v510
        %v1111 = vunpack.c.l.b16 %v511
        %v1112 = vpack.c.b16 %v857, %v856
        %v1113 = vpack.c.b16 %v859, %v858
        %v1114 = vpack.c.b16 %v861, %v860
        %v1115 = vpack.c.b16 %v863, %v862
        %v1116 = vpack.c.b16 %v865, %v864
        %v1117 = vpack.c.b16 %v867, %v866
        %v1118 = vpack.c.b16 %v869, %v868
        %v1119 = vpack.c.b16 %v871, %v870
        %v1120 = vpack.c.b16 %v873, %v872
        %v1121 = vpack.c.b16 %v875, %v874
        %v1122 = vpack.c.b16 %v877, %v876
        %v1123 = vpack.c.b16 %v879, %v878
        %v1124 = vpack.c.b16 %v881, %v880
        %v1125 = vpack.c.b16 %v883, %v882
        %v1126 = vpack.c.b16 %v885, %v884
        %v1127 = vpack.c.b16 %v887, %v886
        %v1128 = vpack.c.b16 %v889, %v888
        %v1129 = vpack.c.b16 %v891, %v890
        %v1130 = vpack.c.b16 %v893, %v892
        %v1131 = vpack.c.b16 %v895, %v894
        %v1132 = vpack.c.b16 %v897, %v896
        %v1133 = vpack.c.b16 %v899, %v898
        %v1134 = vpack.c.b16 %v901, %v900
        %v1135 = vpack.c.b16 %v903, %v902
        %v1136 = vpack.c.b16 %v905, %v904
        %v1137 = vpack.c.b16 %v907, %v906
        %v1138 = vpack.c.b16 %v909, %v908
        %v1139 = vpack.c.b16 %v911, %v910
        %v1140 = vpack.c.b16 %v913, %v912
        %v1141 = vpack.c.b16 %v915, %v914
        %v1142 = vpack.c.b16 %v917, %v916
        %v1143 = vpack.c.b16 %v919, %v918
        %v1144 = vpack.c.b16 %v921, %v920
        %v1145 = vpack.c.b16 %v923, %v922
        %v1146 = vpack.c.b16 %v925, %v924
        %v1147 = vpack.c.b16 %v927, %v926
        %v1148 = vpack.c.b16 %v929, %v928
        %v1149 = vpack.c.b16 %v931, %v930
        %v1150 = vpack.c.b16 %v933, %v932
        %v1151 = vpack.c.b16 %v935, %v934
        %v1152 = vpack.c.b16 %v937, %v936
        %v1153 = vpack.c.b16 %v939, %v938
        %v1154 = vpack.c.b16 %v941, %v940
        %v1155 = vpack.c.b16 %v943, %v942
        %v1156 = vpack.c.b16 %v945, %v944
        %v1157 = vpack.c.b16 %v947, %v946
        %v1158 = vpack.c.b16 %v949, %v948
        %v1159 = vpack.c.b16 %v951, %v950
        %v1160 = vpack.c.b16 %v953, %v952
        %v1161 = vpack.c.b16 %v955, %v954
        %v1162 = vpack.c.b16 %v957, %v956
        %v1163 = vpack.c.b16 %v959, %v958
        %v1164 = vpack.c.b16 %v961, %v960
        %v1165 = vpack.c.b16 %v963, %v962
        %v1166 = vpack.c.b16 %v965, %v964
        %v1167 = vpack.c.b16 %v967, %v966
        %v1168 = vpack.c.b16 %v969, %v968
        %v1169 = vpack.c.b16 %v971, %v970
        %v1170 = vpack.c.b16 %v973, %v972
        %v1171 = vpack.c.b16 %v975, %v974
        %v1172 = vpack.c.b16 %v977, %v976
        %v1173 = vpack.c.b16 %v979, %v978
        %v1174 = vpack.c.b16 %v981, %v980
        %v1175 = vpack.c.b16 %v983, %v982
        %v1176 = vpack.c.b16 %v985, %v984
        %v1177 = vpack.c.b16 %v987, %v986
        %v1178 = vpack.c.b16 %v989, %v988
        %v1179 = vpack.c.b16 %v991, %v990
        %v1180 = vpack.c.b16 %v993, %v992
        %v1181 = vpack.c.b16 %v995, %v994
        %v1182 = vpack.c.b16 %v997, %v996
        %v1183 = vpack.c.b16 %v999, %v998
        %v1184 = vpack.c.b16 %v1001, %v1000
        %v1185 = vpack.c.b16 %v1003, %v1002
        %v1186 = vpack.c.b16 %v1005, %v1004
        %v1187 = vpack.c.b16 %v1007, %v1006
        %v1188 = vpack.c.b16 %v1009, %v1008
        %v1189 = vpack.c.b16 %v1011, %v1010
        %v1190 = vpack.c.b16 %v1013, %v1012
        %v1191 = vpack.c.b16 %v1015, %v1014
        %v1192 = vpack.c.b16 %v1017, %v1016
        %v1193 = vpack.c.b16 %v1019, %v1018
        %v1194 = vpack.c.b16 %v1021, %v1020
        %v1195 = vpack.c.b16 %v1023, %v1022
        %v1196 = vpack.c.b16 %v1025, %v1024
        %v1197 = vpack.c.b16 %v1027, %v1026
        %v1198 = vpack.c.b16 %v1029, %v1028
        %v1199 = vpack.c.b16 %v1031, %v1030
        %v1200 = vpack.c.b16 %v1033, %v1032
        %v1201 = vpack.c.b16 %v1035, %v1034
        %v1202 = vpack.c.b16 %v1037, %v1036
        %v1203 = vpack.c.b16 %v1039, %v1038
        %v1204 = vpack.c.b16 %v1041, %v1040
        %v1205 = vpack.c.b16 %v1043, %v1042
        %v1206 = vpack.c.b16 %v1045, %v1044
        %v1207 = vpack.c.b16 %v1047, %v1046
        %v1208 = vpack.c.b16 %v1049, %v1048
        %v1209 = vpack.c.b16 %v1051, %v1050
        %v1210 = vpack.c.b16 %v1053, %v1052
        %v1211 = vpack.c.b16 %v1055, %v1054
        %v1212 = vpack.c.b16 %v1057, %v1056
        %v1213 = vpack.c.b16 %v1059, %v1058
        %v1214 = vpack.c.b16 %v1061, %v1060
        %v1215 = vpack.c.b16 %v1063, %v1062
        %v1216 = vpack.c.b16 %v1065, %v1064
        %v1217 = vpack.c.b16 %v1067, %v1066
        %v1218 = vpack.c.b16 %v1069, %v1068
        %v1219 = vpack.c.b16 %v1071, %v1070
        %v1220 = vpack.c.b16 %v1073, %v1072
        %v1221 = vpack.c.b16 %v1075, %v1074
        %v1222 = vpack.c.b16 %v1077, %v1076
        %v1223 = vpack.c.b16 %v1079, %v1078
        %v1224 = vpack.c.b16 %v1081, %v1080
        %v1225 = vpack.c.b16 %v1083, %v1082
        %v1226 = vpack.c.b16 %v1085, %v1084
        %v1227 = vpack.c.b16 %v1087, %v1086
        %v1228 = vpack.c.b16 %v1089, %v1088
        %v1229 = vpack.c.b16 %v1091, %v1090
        %v1230 = vpack.c.b16 %v1093, %v1092
        %v1231 = vpack.c.b16 %v1095, %v1094
        %v1232 = vpack.c.b16 %v1097, %v1096
        %v1233 = vpack.c.b16 %v1099, %v1098
        %v1234 = vpack.c.b16 %v1101, %v1100
        %v1235 = vpack.c.b16 %v1103, %v1102
        %v1236 = vpack.c.b16 %v1105, %v1104
        %v1237 = vpack.c.b16 %v1107, %v1106
        %v1238 = vpack.c.b16 %v1109, %v1108
        %v1239 = vpack.c.b16 %v1111, %v1110
        %1368 = vmatprep.subr.bf16.mxu0 0
        %1369 = vmatpush1.bf16.msra.mxu0 %v1112
        %1370 = vmatprep.subr.bf16.mxu0 0
        %1371 = vmatpush1.bf16.msra.mxu0 %v1113
        %1372 = vmatprep.subr.bf16.mxu0 0
        %1373 = vmatpush1.bf16.msra.mxu0 %v1114
        %1374 = vmatprep.subr.bf16.mxu0 0
        %1375 = vmatpush1.bf16.msra.mxu0 %v1115
        %1376 = vmatprep.subr.bf16.mxu0 0
        %1377 = vmatpush1.bf16.msra.mxu0 %v1116
        %1378 = vmatprep.subr.bf16.mxu0 0
        %1379 = vmatpush1.bf16.msra.mxu0 %v1117
        %1380 = vmatprep.subr.bf16.mxu0 0
        %1381 = vmatpush1.bf16.msra.mxu0 %v1118
        %1382 = vmatprep.subr.bf16.mxu0 0
        %1383 = vmatpush1.bf16.msra.mxu0 %v1119
        %1384 = vmatprep.subr.bf16.mxu0 0
        %1385 = vmatpush1.bf16.msra.mxu0 %v1120
        %1386 = vmatprep.subr.bf16.mxu0 0
        %1387 = vmatpush1.bf16.msra.mxu0 %v1121
        %1388 = vmatprep.subr.bf16.mxu0 0
        %1389 = vmatpush1.bf16.msra.mxu0 %v1122
        %1390 = vmatprep.subr.bf16.mxu0 0
        %1391 = vmatpush1.bf16.msra.mxu0 %v1123
        %1392 = vmatprep.subr.bf16.mxu0 0
        %1393 = vmatpush1.bf16.msra.mxu0 %v1124
        %1394 = vmatprep.subr.bf16.mxu0 0
        %1395 = vmatpush1.bf16.msra.mxu0 %v1125
        %1396 = vmatprep.subr.bf16.mxu0 0
        %1397 = vmatpush1.bf16.msra.mxu0 %v1126
        %1398 = vmatprep.subr.bf16.mxu0 0
        %1399 = vmatpush1.bf16.msra.mxu0 %v1127
        %1400 = vmatprep.mubr.bf16.mxu0 %v531
        %1401 = vmatmul.mubr.bf16.gmra.mrb[0].mxu0 %v523
        %v1402 = vpop.f32.mrb[0].mxu0
        %v1403 = vadd.f32 0.0, %v1402
        %v1404 = vpop.f32.mrb[0].mxu0
        %v1405 = vpop.f32.mrb[0].mxu0
        %v1406 = vpop.f32.mrb[0].mxu0
        %1407 = vdwg.mxu0
        %1408 = vmatprep.subr.bf16.mxu0 0
        %1409 = vmatpush1.bf16.msra.mxu0 %v1128
        %1410 = vmatprep.subr.bf16.mxu0 0
        %1411 = vmatpush1.bf16.msra.mxu0 %v1129
        %1412 = vmatprep.subr.bf16.mxu0 0
        %1413 = vmatpush1.bf16.msra.mxu0 %v1130
        %1414 = vmatprep.subr.bf16.mxu0 0
        %1415 = vmatpush1.bf16.msra.mxu0 %v1131
        %1416 = vmatprep.subr.bf16.mxu0 0
        %1417 = vmatpush1.bf16.msra.mxu0 %v1132
        %1418 = vmatprep.subr.bf16.mxu0 0
        %1419 = vmatpush1.bf16.msra.mxu0 %v1133
        %1420 = vmatprep.subr.bf16.mxu0 0
        %1421 = vmatpush1.bf16.msra.mxu0 %v1134
        %1422 = vmatprep.subr.bf16.mxu0 0
        %1423 = vmatpush1.bf16.msra.mxu0 %v1135
        %1424 = vmatprep.subr.bf16.mxu0 0
        %1425 = vmatpush1.bf16.msra.mxu0 %v1136
        %1426 = vmatprep.subr.bf16.mxu0 0
        %1427 = vmatpush1.bf16.msra.mxu0 %v1137
        %1428 = vmatprep.subr.bf16.mxu0 0
        %1429 = vmatpush1.bf16.msra.mxu0 %v1138
        %1430 = vmatprep.subr.bf16.mxu0 0
        %1431 = vmatpush1.bf16.msra.mxu0 %v1139
        %1432 = vmatprep.subr.bf16.mxu0 0
        %1433 = vmatpush1.bf16.msra.mxu0 %v1140
        %1434 = vmatprep.subr.bf16.mxu0 0
        %1435 = vmatpush1.bf16.msra.mxu0 %v1141
        %1436 = vmatprep.subr.bf16.mxu0 0
        %1437 = vmatpush1.bf16.msra.mxu0 %v1142
        %1438 = vmatprep.subr.bf16.mxu0 0
        %1439 = vmatpush1.bf16.msra.mxu0 %v1143
        %1440 = vmatprep.mubr.bf16.mxu0 %v532
        %1441 = vmatmul.mubr.bf16.gmra.mrb[0].mxu0 %v530
        %v1442 = vpop.f32.mrb[0].mxu0
        %v1443 = vadd.f32 %v1403, %v1442
        %v1444 = vpop.f32.mrb[0].mxu0
        %v1445 = vpop.f32.mrb[0].mxu0
        %v1446 = vpop.f32.mrb[0].mxu0
        %1447 = vdwg.mxu0
        %1448 = vmatprep.subr.bf16.mxu0 0
        %1449 = vmatpush1.bf16.msra.mxu0 %v1144
        %1450 = vmatprep.subr.bf16.mxu0 0
        %1451 = vmatpush1.bf16.msra.mxu0 %v1145
        %1452 = vmatprep.subr.bf16.mxu0 0
        %1453 = vmatpush1.bf16.msra.mxu0 %v1146
        %1454 = vmatprep.subr.bf16.mxu0 0
        %1455 = vmatpush1.bf16.msra.mxu0 %v1147
        %1456 = vmatprep.subr.bf16.mxu0 0
        %1457 = vmatpush1.bf16.msra.mxu0 %v1148
        %1458 = vmatprep.subr.bf16.mxu0 0
        %1459 = vmatpush1.bf16.msra.mxu0 %v1149
        %1460 = vmatprep.subr.bf16.mxu0 0
        %1461 = vmatpush1.bf16.msra.mxu0 %v1150
        %1462 = vmatprep.subr.bf16.mxu0 0
        %1463 = vmatpush1.bf16.msra.mxu0 %v1151
        %1464 = vmatprep.subr.bf16.mxu0 0
        %1465 = vmatpush1.bf16.msra.mxu0 %v1152
        %1466 = vmatprep.subr.bf16.mxu0 0
        %1467 = vmatpush1.bf16.msra.mxu0 %v1153
        %1468 = vmatprep.subr.bf16.mxu0 0
        %1469 = vmatpush1.bf16.msra.mxu0 %v1154
        %1470 = vmatprep.subr.bf16.mxu0 0
        %1471 = vmatpush1.bf16.msra.mxu0 %v1155
        %1472 = vmatprep.subr.bf16.mxu0 0
        %1473 = vmatpush1.bf16.msra.mxu0 %v1156
        %1474 = vmatprep.subr.bf16.mxu0 0
        %1475 = vmatpush1.bf16.msra.mxu0 %v1157
        %1476 = vmatprep.subr.bf16.mxu0 0
        %1477 = vmatpush1.bf16.msra.mxu0 %v1158
        %1478 = vmatprep.subr.bf16.mxu0 0
        %1479 = vmatpush1.bf16.msra.mxu0 %v1159
        %1480 = vmatprep.mubr.bf16.mxu0 %v548
        %1481 = vmatmul.mubr.bf16.gmra.mrb[0].mxu0 %v540
        %v1482 = vpop.f32.mrb[0].mxu0
        %v1483 = vadd.f32 %v1443, %v1482
        %v1484 = vpop.f32.mrb[0].mxu0
        %v1485 = vpop.f32.mrb[0].mxu0
        %v1486 = vpop.f32.mrb[0].mxu0
        %1487 = vdwg.mxu0
        %1488 = vmatprep.subr.bf16.mxu0 0
        %1489 = vmatpush1.bf16.msra.mxu0 %v1160
        %1490 = vmatprep.subr.bf16.mxu0 0
        %1491 = vmatpush1.bf16.msra.mxu0 %v1161
        %1492 = vmatprep.subr.bf16.mxu0 0
        %1493 = vmatpush1.bf16.msra.mxu0 %v1162
        %1494 = vmatprep.subr.bf16.mxu0 0
        %1495 = vmatpush1.bf16.msra.mxu0 %v1163
        %1496 = vmatprep.subr.bf16.mxu0 0
        %1497 = vmatpush1.bf16.msra.mxu0 %v1164
        %1498 = vmatprep.subr.bf16.mxu0 0
        %1499 = vmatpush1.bf16.msra.mxu0 %v1165
        %1500 = vmatprep.subr.bf16.mxu0 0
        %1501 = vmatpush1.bf16.msra.mxu0 %v1166
        %1502 = vmatprep.subr.bf16.mxu0 0
        %1503 = vmatpush1.bf16.msra.mxu0 %v1167
        %1504 = vmatprep.subr.bf16.mxu0 0
        %1505 = vmatpush1.bf16.msra.mxu0 %v1168
        %1506 = vmatprep.subr.bf16.mxu0 0
        %1507 = vmatpush1.bf16.msra.mxu0 %v1169
        %1508 = vmatprep.subr.bf16.mxu0 0
        %1509 = vmatpush1.bf16.msra.mxu0 %v1170
        %1510 = vmatprep.subr.bf16.mxu0 0
        %1511 = vmatpush1.bf16.msra.mxu0 %v1171
        %1512 = vmatprep.subr.bf16.mxu0 0
        %1513 = vmatpush1.bf16.msra.mxu0 %v1172
        %1514 = vmatprep.subr.bf16.mxu0 0
        %1515 = vmatpush1.bf16.msra.mxu0 %v1173
        %1516 = vmatprep.subr.bf16.mxu0 0
        %1517 = vmatpush1.bf16.msra.mxu0 %v1174
        %1518 = vmatprep.subr.bf16.mxu0 0
        %1519 = vmatpush1.bf16.msra.mxu0 %v1175
        %1520 = vmatprep.mubr.bf16.mxu0 %v549
        %1521 = vmatmul.mubr.bf16.gmra.mrb[0].mxu0 %v547
        %v1522 = vpop.f32.mrb[0].mxu0
        %v1523 = vadd.f32 %v1483, %v1522
        %v1524 = vpop.f32.mrb[0].mxu0
        %v1525 = vpop.f32.mrb[0].mxu0
        %v1526 = vpop.f32.mrb[0].mxu0
        %1527 = vdwg.mxu0
        %1528 = vmatprep.subr.bf16.mxu0 0
        %1529 = vmatpush1.bf16.msra.mxu0 %v1176
        %1530 = vmatprep.subr.bf16.mxu0 0
        %1531 = vmatpush1.bf16.msra.mxu0 %v1177
        %1532 = vmatprep.subr.bf16.mxu0 0
        %1533 = vmatpush1.bf16.msra.mxu0 %v1178
        %1534 = vmatprep.subr.bf16.mxu0 0
        %1535 = vmatpush1.bf16.msra.mxu0 %v1179
        %1536 = vmatprep.subr.bf16.mxu0 0
        %1537 = vmatpush1.bf16.msra.mxu0 %v1180
        %1538 = vmatprep.subr.bf16.mxu0 0
        %1539 = vmatpush1.bf16.msra.mxu0 %v1181
        %1540 = vmatprep.subr.bf16.mxu0 0
        %1541 = vmatpush1.bf16.msra.mxu0 %v1182
        %1542 = vmatprep.subr.bf16.mxu0 0
        %1543 = vmatpush1.bf16.msra.mxu0 %v1183
        %1544 = vmatprep.subr.bf16.mxu0 0
        %1545 = vmatpush1.bf16.msra.mxu0 %v1184
        %1546 = vmatprep.subr.bf16.mxu0 0
        %1547 = vmatpush1.bf16.msra.mxu0 %v1185
        %1548 = vmatprep.subr.bf16.mxu0 0
        %1549 = vmatpush1.bf16.msra.mxu0 %v1186
        %1550 = vmatprep.subr.bf16.mxu0 0
        %1551 = vmatpush1.bf16.msra.mxu0 %v1187
        %1552 = vmatprep.subr.bf16.mxu0 0
        %1553 = vmatpush1.bf16.msra.mxu0 %v1188
        %1554 = vmatprep.subr.bf16.mxu0 0
        %1555 = vmatpush1.bf16.msra.mxu0 %v1189
        %1556 = vmatprep.subr.bf16.mxu0 0
        %1557 = vmatpush1.bf16.msra.mxu0 %v1190
        %1558 = vmatprep.subr.bf16.mxu0 0
        %1559 = vmatpush1.bf16.msra.mxu0 %v1191
        %1560 = vmatprep.mubr.bf16.mxu0 %v565
        %1561 = vmatmul.mubr.bf16.gmra.mrb[0].mxu0 %v557
        %v1562 = vpop.f32.mrb[0].mxu0
        %v1563 = vadd.f32 %v1523, %v1562
        %v1564 = vpop.f32.mrb[0].mxu0
        %v1565 = vpop.f32.mrb[0].mxu0
        %v1566 = vpop.f32.mrb[0].mxu0
        %1567 = vdwg.mxu0
        %1568 = vmatprep.subr.bf16.mxu0 0
        %1569 = vmatpush1.bf16.msra.mxu0 %v1192
        %1570 = vmatprep.subr.bf16.mxu0 0
        %1571 = vmatpush1.bf16.msra.mxu0 %v1193
        %1572 = vmatprep.subr.bf16.mxu0 0
        %1573 = vmatpush1.bf16.msra.mxu0 %v1194
        %1574 = vmatprep.subr.bf16.mxu0 0
        %1575 = vmatpush1.bf16.msra.mxu0 %v1195
        %1576 = vmatprep.subr.bf16.mxu0 0
        %1577 = vmatpush1.bf16.msra.mxu0 %v1196
        %1578 = vmatprep.subr.bf16.mxu0 0
        %1579 = vmatpush1.bf16.msra.mxu0 %v1197
        %1580 = vmatprep.subr.bf16.mxu0 0
        %1581 = vmatpush1.bf16.msra.mxu0 %v1198
        %1582 = vmatprep.subr.bf16.mxu0 0
        %1583 = vmatpush1.bf16.msra.mxu0 %v1199
        %1584 = vmatprep.subr.bf16.mxu0 0
        %1585 = vmatpush1.bf16.msra.mxu0 %v1200
        %1586 = vmatprep.subr.bf16.mxu0 0
        %1587 = vmatpush1.bf16.msra.mxu0 %v1201
        %1588 = vmatprep.subr.bf16.mxu0 0
        %1589 = vmatpush1.bf16.msra.mxu0 %v1202
        %1590 = vmatprep.subr.bf16.mxu0 0
        %1591 = vmatpush1.bf16.msra.mxu0 %v1203
        %1592 = vmatprep.subr.bf16.mxu0 0
        %1593 = vmatpush1.bf16.msra.mxu0 %v1204
        %1594 = vmatprep.subr.bf16.mxu0 0
        %1595 = vmatpush1.bf16.msra.mxu0 %v1205
        %1596 = vmatprep.subr.bf16.mxu0 0
        %1597 = vmatpush1.bf16.msra.mxu0 %v1206
        %1598 = vmatprep.subr.bf16.mxu0 0
        %1599 = vmatpush1.bf16.msra.mxu0 %v1207
        %1600 = vmatprep.mubr.bf16.mxu0 %v566
        %1601 = vmatmul.mubr.bf16.gmra.mrb[0].mxu0 %v564
        %v1602 = vpop.f32.mrb[0].mxu0
        %v1603 = vadd.f32 %v1563, %v1602
        %v1604 = vpop.f32.mrb[0].mxu0
        %v1605 = vpop.f32.mrb[0].mxu0
        %v1606 = vpop.f32.mrb[0].mxu0
        %1607 = vdwg.mxu0
        %1608 = vmatprep.subr.bf16.mxu0 0
        %1609 = vmatpush1.bf16.msra.mxu0 %v1208
        %1610 = vmatprep.subr.bf16.mxu0 0
        %1611 = vmatpush1.bf16.msra.mxu0 %v1209
        %1612 = vmatprep.subr.bf16.mxu0 0
        %1613 = vmatpush1.bf16.msra.mxu0 %v1210
        %1614 = vmatprep.subr.bf16.mxu0 0
        %1615 = vmatpush1.bf16.msra.mxu0 %v1211
        %1616 = vmatprep.subr.bf16.mxu0 0
        %1617 = vmatpush1.bf16.msra.mxu0 %v1212
        %1618 = vmatprep.subr.bf16.mxu0 0
        %1619 = vmatpush1.bf16.msra.mxu0 %v1213
        %1620 = vmatprep.subr.bf16.mxu0 0
        %1621 = vmatpush1.bf16.msra.mxu0 %v1214
        %1622 = vmatprep.subr.bf16.mxu0 0
        %1623 = vmatpush1.bf16.msra.mxu0 %v1215
        %1624 = vmatprep.subr.bf16.mxu0 0
        %1625 = vmatpush1.bf16.msra.mxu0 %v1216
        %1626 = vmatprep.subr.bf16.mxu0 0
        %1627 = vmatpush1.bf16.msra.mxu0 %v1217
        %1628 = vmatprep.subr.bf16.mxu0 0
        %1629 = vmatpush1.bf16.msra.mxu0 %v1218
        %1630 = vmatprep.subr.bf16.mxu0 0
        %1631 = vmatpush1.bf16.msra.mxu0 %v1219
        %1632 = vmatprep.subr.bf16.mxu0 0
        %1633 = vmatpush1.bf16.msra.mxu0 %v1220
        %1634 = vmatprep.subr.bf16.mxu0 0
        %1635 = vmatpush1.bf16.msra.mxu0 %v1221
        %1636 = vmatprep.subr.bf16.mxu0 0
        %1637 = vmatpush1.bf16.msra.mxu0 %v1222
        %1638 = vmatprep.subr.bf16.mxu0 0
        %1639 = vmatpush1.bf16.msra.mxu0 %v1223
        %1640 = vmatprep.mubr.bf16.mxu0 %v582
        %1641 = vmatmul.mubr.bf16.gmra.mrb[0].mxu0 %v574
        %v1642 = vpop.f32.mrb[0].mxu0
        %v1643 = vadd.f32 %v1603, %v1642
        %v1644 = vpop.f32.mrb[0].mxu0
        %v1645 = vpop.f32.mrb[0].mxu0
        %v1646 = vpop.f32.mrb[0].mxu0
        %1647 = vdwg.mxu0
        %1648 = vmatprep.subr.bf16.mxu0 0
        %1649 = vmatpush1.bf16.msra.mxu0 %v1224
        %1650 = vmatprep.subr.bf16.mxu0 0
        %1651 = vmatpush1.bf16.msra.mxu0 %v1225
        %1652 = vmatprep.subr.bf16.mxu0 0
        %1653 = vmatpush1.bf16.msra.mxu0 %v1226
        %1654 = vmatprep.subr.bf16.mxu0 0
        %1655 = vmatpush1.bf16.msra.mxu0 %v1227
        %1656 = vmatprep.subr.bf16.mxu0 0
        %1657 = vmatpush1.bf16.msra.mxu0 %v1228
        %1658 = vmatprep.subr.bf16.mxu0 0
        %1659 = vmatpush1.bf16.msra.mxu0 %v1229
        %1660 = vmatprep.subr.bf16.mxu0 0
        %1661 = vmatpush1.bf16.msra.mxu0 %v1230
        %1662 = vmatprep.subr.bf16.mxu0 0
        %1663 = vmatpush1.bf16.msra.mxu0 %v1231
        %1664 = vmatprep.subr.bf16.mxu0 0
        %1665 = vmatpush1.bf16.msra.mxu0 %v1232
        %1666 = vmatprep.subr.bf16.mxu0 0
        %1667 = vmatpush1.bf16.msra.mxu0 %v1233
        %1668 = vmatprep.subr.bf16.mxu0 0
        %1669 = vmatpush1.bf16.msra.mxu0 %v1234
        %1670 = vmatprep.subr.bf16.mxu0 0
        %1671 = vmatpush1.bf16.msra.mxu0 %v1235
        %1672 = vmatprep.subr.bf16.mxu0 0
        %1673 = vmatpush1.bf16.msra.mxu0 %v1236
        %1674 = vmatprep.subr.bf16.mxu0 0
        %1675 = vmatpush1.bf16.msra.mxu0 %v1237
        %1676 = vmatprep.subr.bf16.mxu0 0
        %1677 = vmatpush1.bf16.msra.mxu0 %v1238
        %1678 = vmatprep.subr.bf16.mxu0 0
        %1679 = vmatpush1.bf16.msra.mxu0 %v1239
        %1680 = vmatprep.mubr.bf16.mxu0 %v583
        %1681 = vmatmul.mubr.bf16.gmra.mrb[0].mxu0 %v581
        %v1682 = vpop.f32.mrb[0].mxu0
        %v1683 = vadd.f32 %v1643, %v1682
        %v1684 = vpop.f32.mrb[0].mxu0
        %v1685 = vpop.f32.mrb[0].mxu0
        %v1686 = vpop.f32.mrb[0].mxu0
        %1687 = vdwg.mxu0
        %1688 = vst [vmem:[%s250] sm:$0xf] %v1683
        %v1689 = vld [vmem:[%s246] sm:$0xff]
        %v1690 = vld [vmem:[%s246 + $0x8] sm:$0xff]
        %v1691 = vld [vmem:[%s3] sm:$0x1]
        %v1693 = vlaneseq
        %v1694 = vshrl.u32 %v1693, 7
        %v1695 = vsub.s32 0, %v1694
        %v1696 = vrot.slane %v1691, %v1695
        %v1700 = vcombine.high %v1689, %v1689
        %v1702 = vunpack.c.l.s4 1966171168
        %v1703 = vunpack.c.0.s8 %v1702
        %v1704 = vlaneseq
        %v1705 = vshrl.u32 %v1704, 7
        %v1706 = vsub.s32 %v1703, %v1705
        %v1707 = vrot.slane %v1689, %v1706
        %v1709 = vunpack.c.l.s4 1966171168
        %v1710 = vunpack.c.0.s8 %v1709
        %v1711 = vlaneseq
        %v1712 = vshrl.u32 %v1711, 7
        %v1713 = vsub.s32 %v1710, %v1712
        %v1714 = vrot.slane %v1700, %v1713
        %v1715 = vcombine.high %v1707, %v1707
        %v1716 = vcombine.high %v1714, %v1714
        %v1718 = vunpack.c.l.s4 1966171168
        %v1719 = vunpack.c.0.s8 %v1718
        %v1720 = vlaneseq
        %v1721 = vshrl.u32 %v1720, 7
        %v1722 = vsub.s32 %v1719, %v1721
        %v1723 = vrot.slane %v1707, %v1722
        %v1725 = vunpack.c.l.s4 1966171168
        %v1726 = vunpack.c.0.s8 %v1725
        %v1727 = vlaneseq
        %v1728 = vshrl.u32 %v1727, 7
        %v1729 = vsub.s32 %v1726, %v1728
        %v1730 = vrot.slane %v1714, %v1729
        %v1732 = vunpack.c.l.s4 1966171168
        %v1733 = vunpack.c.0.s8 %v1732
        %v1734 = vlaneseq
        %v1735 = vshrl.u32 %v1734, 7
        %v1736 = vsub.s32 %v1733, %v1735
        %v1737 = vrot.slane %v1715, %v1736
        %v1739 = vunpack.c.l.s4 1966171168
        %v1740 = vunpack.c.0.s8 %v1739
        %v1741 = vlaneseq
        %v1742 = vshrl.u32 %v1741, 7
        %v1743 = vsub.s32 %v1740, %v1742
        %v1744 = vrot.slane %v1716, %v1743
        %v1745 = vcombine.high %v1723, %v1723
        %v1746 = vcombine.high %v1730, %v1730
        %v1747 = vcombine.high %v1737, %v1737
        %v1748 = vcombine.high %v1744, %v1744
        %v1749 = vcombine.high %v1690, %v1690
        %v1751 = vunpack.c.l.s4 1966171168
        %v1752 = vunpack.c.0.s8 %v1751
        %v1753 = vlaneseq
        %v1754 = vshrl.u32 %v1753, 7
        %v1755 = vsub.s32 %v1752, %v1754
        %v1756 = vrot.slane %v1690, %v1755
        %v1758 = vunpack.c.l.s4 1966171168
        %v1759 = vunpack.c.0.s8 %v1758
        %v1760 = vlaneseq
        %v1761 = vshrl.u32 %v1760, 7
        %v1762 = vsub.s32 %v1759, %v1761
        %v1763 = vrot.slane %v1749, %v1762
        %v1764 = vcombine.high %v1756, %v1756
        %v1765 = vcombine.high %v1763, %v1763
        %v1767 = vunpack.c.l.s4 1966171168
        %v1768 = vunpack.c.0.s8 %v1767
        %v1769 = vlaneseq
        %v1770 = vshrl.u32 %v1769, 7
        %v1771 = vsub.s32 %v1768, %v1770
        %v1772 = vrot.slane %v1756, %v1771
        %v1774 = vunpack.c.l.s4 1966171168
        %v1775 = vunpack.c.0.s8 %v1774
        %v1776 = vlaneseq
        %v1777 = vshrl.u32 %v1776, 7
        %v1778 = vsub.s32 %v1775, %v1777
        %v1779 = vrot.slane %v1763, %v1778
        %v1781 = vunpack.c.l.s4 1966171168
        %v1782 = vunpack.c.0.s8 %v1781
        %v1783 = vlaneseq
        %v1784 = vshrl.u32 %v1783, 7
        %v1785 = vsub.s32 %v1782, %v1784
        %v1786 = vrot.slane %v1764, %v1785
        %v1788 = vunpack.c.l.s4 1966171168
        %v1789 = vunpack.c.0.s8 %v1788
        %v1790 = vlaneseq
        %v1791 = vshrl.u32 %v1790, 7
        %v1792 = vsub.s32 %v1789, %v1791
        %v1793 = vrot.slane %v1765, %v1792
        %v1794 = vcombine.high %v1772, %v1772
        %v1795 = vcombine.high %v1779, %v1779
        %v1796 = vcombine.high %v1786, %v1786
        %v1797 = vcombine.high %v1793, %v1793
        %1814 = vmatprep.subr.bf16.mxu0 %v531
        %1815 = vmatpush1.bf16.xpose.msra.mxu0 %v523
        %1816 = vmatprep.subr.bf16.mxu0 0
        %1817 = vmatpush1.bf16.xpose.msra.mxu0 0
        %1818 = vmatprep.subr.bf16.mxu0 0
        %1819 = vmatpush1.bf16.xpose.msra.mxu0 0
        %1820 = vmatprep.subr.bf16.mxu0 0
        %1821 = vmatpush1.bf16.xpose.msra.mxu0 0
        %1822 = vmatprep.subr.bf16.mxu0 0
        %1823 = vmatpush1.bf16.xpose.msra.mxu0 0
        %1824 = vmatprep.subr.bf16.mxu0 0
        %1825 = vmatpush1.bf16.xpose.msra.mxu0 0
        %1826 = vmatprep.subr.bf16.mxu0 0
        %1827 = vmatpush1.bf16.xpose.msra.mxu0 0
        %1828 = vmatprep.subr.bf16.mxu0 0
        %1829 = vmatpush1.bf16.xpose.msra.mxu0 0
        %1830 = vmatprep.subr.bf16.mxu0 0
        %1831 = vmatpush1.bf16.xpose.msra.mxu0 0
        %1832 = vmatprep.subr.bf16.mxu0 0
        %1833 = vmatpush1.bf16.xpose.msra.mxu0 0
        %1834 = vmatprep.subr.bf16.mxu0 0
        %1835 = vmatpush1.bf16.xpose.msra.mxu0 0
        %1836 = vmatprep.subr.bf16.mxu0 0
        %1837 = vmatpush1.bf16.xpose.msra.mxu0 0
        %1838 = vmatprep.subr.bf16.mxu0 0
        %1839 = vmatpush1.bf16.xpose.msra.mxu0 0
        %1840 = vmatprep.subr.bf16.mxu0 0
        %1841 = vmatpush1.bf16.xpose.msra.mxu0 0
        %1842 = vmatprep.subr.bf16.mxu0 0
        %1843 = vmatpush1.bf16.xpose.msra.mxu0 0
        %1844 = vmatprep.subr.bf16.mxu0 0
        %1845 = vmatpush1.bf16.xpose.msra.mxu0 0
        %1846 = vmatprep.mubr.bf16.mxu0 %v1737
        %1847 = vmatmul.mubr.bf16.gmra.mrb[0].mxu0 %v1723
        %v1848 = vpop.f32.mrb[0].mxu0
        %v1849 = vadd.f32 %v1696, %v1848
        %v1850 = vpop.f32.mrb[0].mxu0
        %v1851 = vpop.f32.mrb[0].mxu0
        %v1852 = vpop.f32.mrb[0].mxu0
        %1853 = vdwg.mxu0
        %1854 = vmatprep.subr.bf16.mxu0 %v532
        %1855 = vmatpush1.bf16.xpose.msra.mxu0 %v530
        %1856 = vmatprep.subr.bf16.mxu0 0
        %1857 = vmatpush1.bf16.xpose.msra.mxu0 0
        %1858 = vmatprep.subr.bf16.mxu0 0
        %1859 = vmatpush1.bf16.xpose.msra.mxu0 0
        %1860 = vmatprep.subr.bf16.mxu0 0
        %1861 = vmatpush1.bf16.xpose.msra.mxu0 0
        %1862 = vmatprep.subr.bf16.mxu0 0
        %1863 = vmatpush1.bf16.xpose.msra.mxu0 0
        %1864 = vmatprep.subr.bf16.mxu0 0
        %1865 = vmatpush1.bf16.xpose.msra.mxu0 0
        %1866 = vmatprep.subr.bf16.mxu0 0
        %1867 = vmatpush1.bf16.xpose.msra.mxu0 0
        %1868 = vmatprep.subr.bf16.mxu0 0
        %1869 = vmatpush1.bf16.xpose.msra.mxu0 0
        %1870 = vmatprep.subr.bf16.mxu0 0
        %1871 = vmatpush1.bf16.xpose.msra.mxu0 0
        %1872 = vmatprep.subr.bf16.mxu0 0
        %1873 = vmatpush1.bf16.xpose.msra.mxu0 0
        %1874 = vmatprep.subr.bf16.mxu0 0
        %1875 = vmatpush1.bf16.xpose.msra.mxu0 0
        %1876 = vmatprep.subr.bf16.mxu0 0
        %1877 = vmatpush1.bf16.xpose.msra.mxu0 0
        %1878 = vmatprep.subr.bf16.mxu0 0
        %1879 = vmatpush1.bf16.xpose.msra.mxu0 0
        %1880 = vmatprep.subr.bf16.mxu0 0
        %1881 = vmatpush1.bf16.xpose.msra.mxu0 0
        %1882 = vmatprep.subr.bf16.mxu0 0
        %1883 = vmatpush1.bf16.xpose.msra.mxu0 0
        %1884 = vmatprep.subr.bf16.mxu0 0
        %1885 = vmatpush1.bf16.xpose.msra.mxu0 0
        %1886 = vmatprep.mubr.bf16.mxu0 %v1747
        %1887 = vmatmul.mubr.bf16.gmra.mrb[0].mxu0 %v1745
        %v1888 = vpop.f32.mrb[0].mxu0
        %v1889 = vadd.f32 %v1849, %v1888
        %v1890 = vpop.f32.mrb[0].mxu0
        %v1891 = vpop.f32.mrb[0].mxu0
        %v1892 = vpop.f32.mrb[0].mxu0
        %1893 = vdwg.mxu0
        %1894 = vmatprep.subr.bf16.mxu0 %v548
        %1895 = vmatpush1.bf16.xpose.msra.mxu0 %v540
        %1896 = vmatprep.subr.bf16.mxu0 0
        %1897 = vmatpush1.bf16.xpose.msra.mxu0 0
        %1898 = vmatprep.subr.bf16.mxu0 0
        %1899 = vmatpush1.bf16.xpose.msra.mxu0 0
        %1900 = vmatprep.subr.bf16.mxu0 0
        %1901 = vmatpush1.bf16.xpose.msra.mxu0 0
        %1902 = vmatprep.subr.bf16.mxu0 0
        %1903 = vmatpush1.bf16.xpose.msra.mxu0 0
        %1904 = vmatprep.subr.bf16.mxu0 0
        %1905 = vmatpush1.bf16.xpose.msra.mxu0 0
        %1906 = vmatprep.subr.bf16.mxu0 0
        %1907 = vmatpush1.bf16.xpose.msra.mxu0 0
        %1908 = vmatprep.subr.bf16.mxu0 0
        %1909 = vmatpush1.bf16.xpose.msra.mxu0 0
        %1910 = vmatprep.subr.bf16.mxu0 0
        %1911 = vmatpush1.bf16.xpose.msra.mxu0 0
        %1912 = vmatprep.subr.bf16.mxu0 0
        %1913 = vmatpush1.bf16.xpose.msra.mxu0 0
        %1914 = vmatprep.subr.bf16.mxu0 0
        %1915 = vmatpush1.bf16.xpose.msra.mxu0 0
        %1916 = vmatprep.subr.bf16.mxu0 0
        %1917 = vmatpush1.bf16.xpose.msra.mxu0 0
        %1918 = vmatprep.subr.bf16.mxu0 0
        %1919 = vmatpush1.bf16.xpose.msra.mxu0 0
        %1920 = vmatprep.subr.bf16.mxu0 0
        %1921 = vmatpush1.bf16.xpose.msra.mxu0 0
        %1922 = vmatprep.subr.bf16.mxu0 0
        %1923 = vmatpush1.bf16.xpose.msra.mxu0 0
        %1924 = vmatprep.subr.bf16.mxu0 0
        %1925 = vmatpush1.bf16.xpose.msra.mxu0 0
        %1926 = vmatprep.mubr.bf16.mxu0 %v1744
        %1927 = vmatmul.mubr.bf16.gmra.mrb[0].mxu0 %v1730
        %v1928 = vpop.f32.mrb[0].mxu0
        %v1929 = vadd.f32 %v1889, %v1928
        %v1930 = vpop.f32.mrb[0].mxu0
        %v1931 = vpop.f32.mrb[0].mxu0
        %v1932 = vpop.f32.mrb[0].mxu0
        %1933 = vdwg.mxu0
        %1934 = vmatprep.subr.bf16.mxu0 %v549
        %1935 = vmatpush1.bf16.xpose.msra.mxu0 %v547
        %1936 = vmatprep.subr.bf16.mxu0 0
        %1937 = vmatpush1.bf16.xpose.msra.mxu0 0
        %1938 = vmatprep.subr.bf16.mxu0 0
        %1939 = vmatpush1.bf16.xpose.msra.mxu0 0
        %1940 = vmatprep.subr.bf16.mxu0 0
        %1941 = vmatpush1.bf16.xpose.msra.mxu0 0
        %1942 = vmatprep.subr.bf16.mxu0 0
        %1943 = vmatpush1.bf16.xpose.msra.mxu0 0
        %1944 = vmatprep.subr.bf16.mxu0 0
        %1945 = vmatpush1.bf16.xpose.msra.mxu0 0
        %1946 = vmatprep.subr.bf16.mxu0 0
        %1947 = vmatpush1.bf16.xpose.msra.mxu0 0
        %1948 = vmatprep.subr.bf16.mxu0 0
        %1949 = vmatpush1.bf16.xpose.msra.mxu0 0
        %1950 = vmatprep.subr.bf16.mxu0 0
        %1951 = vmatpush1.bf16.xpose.msra.mxu0 0
        %1952 = vmatprep.subr.bf16.mxu0 0
        %1953 = vmatpush1.bf16.xpose.msra.mxu0 0
        %1954 = vmatprep.subr.bf16.mxu0 0
        %1955 = vmatpush1.bf16.xpose.msra.mxu0 0
        %1956 = vmatprep.subr.bf16.mxu0 0
        %1957 = vmatpush1.bf16.xpose.msra.mxu0 0
        %1958 = vmatprep.subr.bf16.mxu0 0
        %1959 = vmatpush1.bf16.xpose.msra.mxu0 0
        %1960 = vmatprep.subr.bf16.mxu0 0
        %1961 = vmatpush1.bf16.xpose.msra.mxu0 0
        %1962 = vmatprep.subr.bf16.mxu0 0
        %1963 = vmatpush1.bf16.xpose.msra.mxu0 0
        %1964 = vmatprep.subr.bf16.mxu0 0
        %1965 = vmatpush1.bf16.xpose.msra.mxu0 0
        %1966 = vmatprep.mubr.bf16.mxu0 %v1748
        %1967 = vmatmul.mubr.bf16.gmra.mrb[0].mxu0 %v1746
        %v1968 = vpop.f32.mrb[0].mxu0
        %v1969 = vadd.f32 %v1929, %v1968
        %v1970 = vpop.f32.mrb[0].mxu0
        %v1971 = vpop.f32.mrb[0].mxu0
        %v1972 = vpop.f32.mrb[0].mxu0
        %1973 = vdwg.mxu0
        %1974 = vmatprep.subr.bf16.mxu0 %v565
        %1975 = vmatpush1.bf16.xpose.msra.mxu0 %v557
        %1976 = vmatprep.subr.bf16.mxu0 0
        %1977 = vmatpush1.bf16.xpose.msra.mxu0 0
        %1978 = vmatprep.subr.bf16.mxu0 0
        %1979 = vmatpush1.bf16.xpose.msra.mxu0 0
        %1980 = vmatprep.subr.bf16.mxu0 0
        %1981 = vmatpush1.bf16.xpose.msra.mxu0 0
        %1982 = vmatprep.subr.bf16.mxu0 0
        %1983 = vmatpush1.bf16.xpose.msra.mxu0 0
        %1984 = vmatprep.subr.bf16.mxu0 0
        %1985 = vmatpush1.bf16.xpose.msra.mxu0 0
        %1986 = vmatprep.subr.bf16.mxu0 0
        %1987 = vmatpush1.bf16.xpose.msra.mxu0 0
        %1988 = vmatprep.subr.bf16.mxu0 0
        %1989 = vmatpush1.bf16.xpose.msra.mxu0 0
        %1990 = vmatprep.subr.bf16.mxu0 0
        %1991 = vmatpush1.bf16.xpose.msra.mxu0 0
        %1992 = vmatprep.subr.bf16.mxu0 0
        %1993 = vmatpush1.bf16.xpose.msra.mxu0 0
        %1994 = vmatprep.subr.bf16.mxu0 0
        %1995 = vmatpush1.bf16.xpose.msra.mxu0 0
        %1996 = vmatprep.subr.bf16.mxu0 0
        %1997 = vmatpush1.bf16.xpose.msra.mxu0 0
        %1998 = vmatprep.subr.bf16.mxu0 0
        %1999 = vmatpush1.bf16.xpose.msra.mxu0 0
        %2000 = vmatprep.subr.bf16.mxu0 0
        %2001 = vmatpush1.bf16.xpose.msra.mxu0 0
        %2002 = vmatprep.subr.bf16.mxu0 0
        %2003 = vmatpush1.bf16.xpose.msra.mxu0 0
        %2004 = vmatprep.subr.bf16.mxu0 0
        %2005 = vmatpush1.bf16.xpose.msra.mxu0 0
        %2006 = vmatprep.mubr.bf16.mxu0 %v1786
        %2007 = vmatmul.mubr.bf16.gmra.mrb[0].mxu0 %v1772
        %v2008 = vpop.f32.mrb[0].mxu0
        %v2009 = vadd.f32 %v1969, %v2008
        %v2010 = vpop.f32.mrb[0].mxu0
        %v2011 = vpop.f32.mrb[0].mxu0
        %v2012 = vpop.f32.mrb[0].mxu0
        %2013 = vdwg.mxu0
        %2014 = vmatprep.subr.bf16.mxu0 %v566
        %2015 = vmatpush1.bf16.xpose.msra.mxu0 %v564
        %2016 = vmatprep.subr.bf16.mxu0 0
        %2017 = vmatpush1.bf16.xpose.msra.mxu0 0
        %2018 = vmatprep.subr.bf16.mxu0 0
        %2019 = vmatpush1.bf16.xpose.msra.mxu0 0
        %2020 = vmatprep.subr.bf16.mxu0 0
        %2021 = vmatpush1.bf16.xpose.msra.mxu0 0
        %2022 = vmatprep.subr.bf16.mxu0 0
        %2023 = vmatpush1.bf16.xpose.msra.mxu0 0
        %2024 = vmatprep.subr.bf16.mxu0 0
        %2025 = vmatpush1.bf16.xpose.msra.mxu0 0
        %2026 = vmatprep.subr.bf16.mxu0 0
        %2027 = vmatpush1.bf16.xpose.msra.mxu0 0
        %2028 = vmatprep.subr.bf16.mxu0 0
        %2029 = vmatpush1.bf16.xpose.msra.mxu0 0
        %2030 = vmatprep.subr.bf16.mxu0 0
        %2031 = vmatpush1.bf16.xpose.msra.mxu0 0
        %2032 = vmatprep.subr.bf16.mxu0 0
        %2033 = vmatpush1.bf16.xpose.msra.mxu0 0
        %2034 = vmatprep.subr.bf16.mxu0 0
        %2035 = vmatpush1.bf16.xpose.msra.mxu0 0
        %2036 = vmatprep.subr.bf16.mxu0 0
        %2037 = vmatpush1.bf16.xpose.msra.mxu0 0
        %2038 = vmatprep.subr.bf16.mxu0 0
        %2039 = vmatpush1.bf16.xpose.msra.mxu0 0
        %2040 = vmatprep.subr.bf16.mxu0 0
        %2041 = vmatpush1.bf16.xpose.msra.mxu0 0
        %2042 = vmatprep.subr.bf16.mxu0 0
        %2043 = vmatpush1.bf16.xpose.msra.mxu0 0
        %2044 = vmatprep.subr.bf16.mxu0 0
        %2045 = vmatpush1.bf16.xpose.msra.mxu0 0
        %2046 = vmatprep.mubr.bf16.mxu0 %v1796
        %2047 = vmatmul.mubr.bf16.gmra.mrb[0].mxu0 %v1794
        %v2048 = vpop.f32.mrb[0].mxu0
        %v2049 = vadd.f32 %v2009, %v2048
        %v2050 = vpop.f32.mrb[0].mxu0
        %v2051 = vpop.f32.mrb[0].mxu0
        %v2052 = vpop.f32.mrb[0].mxu0
        %2053 = vdwg.mxu0
        %2054 = vmatprep.subr.bf16.mxu0 %v582
        %2055 = vmatpush1.bf16.xpose.msra.mxu0 %v574
        %2056 = vmatprep.subr.bf16.mxu0 0
        %2057 = vmatpush1.bf16.xpose.msra.mxu0 0
        %2058 = vmatprep.subr.bf16.mxu0 0
        %2059 = vmatpush1.bf16.xpose.msra.mxu0 0
        %2060 = vmatprep.subr.bf16.mxu0 0
        %2061 = vmatpush1.bf16.xpose.msra.mxu0 0
        %2062 = vmatprep.subr.bf16.mxu0 0
        %2063 = vmatpush1.bf16.xpose.msra.mxu0 0
        %2064 = vmatprep.subr.bf16.mxu0 0
        %2065 = vmatpush1.bf16.xpose.msra.mxu0 0
        %2066 = vmatprep.subr.bf16.mxu0 0
        %2067 = vmatpush1.bf16.xpose.msra.mxu0 0
        %2068 = vmatprep.subr.bf16.mxu0 0
        %2069 = vmatpush1.bf16.xpose.msra.mxu0 0
        %2070 = vmatprep.subr.bf16.mxu0 0
        %2071 = vmatpush1.bf16.xpose.msra.mxu0 0
        %2072 = vmatprep.subr.bf16.mxu0 0
        %2073 = vmatpush1.bf16.xpose.msra.mxu0 0
        %2074 = vmatprep.subr.bf16.mxu0 0
        %2075 = vmatpush1.bf16.xpose.msra.mxu0 0
        %2076 = vmatprep.subr.bf16.mxu0 0
        %2077 = vmatpush1.bf16.xpose.msra.mxu0 0
        %2078 = vmatprep.subr.bf16.mxu0 0
        %2079 = vmatpush1.bf16.xpose.msra.mxu0 0
        %2080 = vmatprep.subr.bf16.mxu0 0
        %2081 = vmatpush1.bf16.xpose.msra.mxu0 0
        %2082 = vmatprep.subr.bf16.mxu0 0
        %2083 = vmatpush1.bf16.xpose.msra.mxu0 0
        %2084 = vmatprep.subr.bf16.mxu0 0
        %2085 = vmatpush1.bf16.xpose.msra.mxu0 0
        %2086 = vmatprep.mubr.bf16.mxu0 %v1793
        %2087 = vmatmul.mubr.bf16.gmra.mrb[0].mxu0 %v1779
        %v2088 = vpop.f32.mrb[0].mxu0
        %v2089 = vadd.f32 %v2049, %v2088
        %v2090 = vpop.f32.mrb[0].mxu0
        %v2091 = vpop.f32.mrb[0].mxu0
        %v2092 = vpop.f32.mrb[0].mxu0
        %2093 = vdwg.mxu0
        %2094 = vmatprep.subr.bf16.mxu0 %v583
        %2095 = vmatpush1.bf16.xpose.msra.mxu0 %v581
        %2096 = vmatprep.subr.bf16.mxu0 0
        %2097 = vmatpush1.bf16.xpose.msra.mxu0 0
        %2098 = vmatprep.subr.bf16.mxu0 0
        %2099 = vmatpush1.bf16.xpose.msra.mxu0 0
        %2100 = vmatprep.subr.bf16.mxu0 0
        %2101 = vmatpush1.bf16.xpose.msra.mxu0 0
        %2102 = vmatprep.subr.bf16.mxu0 0
        %2103 = vmatpush1.bf16.xpose.msra.mxu0 0
        %2104 = vmatprep.subr.bf16.mxu0 0
        %2105 = vmatpush1.bf16.xpose.msra.mxu0 0
        %2106 = vmatprep.subr.bf16.mxu0 0
        %2107 = vmatpush1.bf16.xpose.msra.mxu0 0
        %2108 = vmatprep.subr.bf16.mxu0 0
        %2109 = vmatpush1.bf16.xpose.msra.mxu0 0
        %2110 = vmatprep.subr.bf16.mxu0 0
        %2111 = vmatpush1.bf16.xpose.msra.mxu0 0
        %2112 = vmatprep.subr.bf16.mxu0 0
        %2113 = vmatpush1.bf16.xpose.msra.mxu0 0
        %2114 = vmatprep.subr.bf16.mxu0 0
        %2115 = vmatpush1.bf16.xpose.msra.mxu0 0
        %2116 = vmatprep.subr.bf16.mxu0 0
        %2117 = vmatpush1.bf16.xpose.msra.mxu0 0
        %2118 = vmatprep.subr.bf16.mxu0 0
        %2119 = vmatpush1.bf16.xpose.msra.mxu0 0
        %2120 = vmatprep.subr.bf16.mxu0 0
        %2121 = vmatpush1.bf16.xpose.msra.mxu0 0
        %2122 = vmatprep.subr.bf16.mxu0 0
        %2123 = vmatpush1.bf16.xpose.msra.mxu0 0
        %2124 = vmatprep.subr.bf16.mxu0 0
        %2125 = vmatpush1.bf16.xpose.msra.mxu0 0
        %2126 = vmatprep.mubr.bf16.mxu0 %v1797
        %2127 = vmatmul.mubr.bf16.gmra.mrb[0].mxu0 %v1795
        %v2128 = vpop.f32.mrb[0].mxu0
        %v2129 = vadd.f32 %v2089, %v2128
        %v2130 = vpop.f32.mrb[0].mxu0
        %v2131 = vpop.f32.mrb[0].mxu0
        %v2132 = vpop.f32.mrb[0].mxu0
        %2133 = vdwg.mxu0
        %vm2134 = vcmask 25600
        %2135 = vst.msk [vmem:[%s231] sm:$0x3] %vm2134, %v2129
        %s2136 = sand.u32 %s122, 1
        %s2137 = scalar_lea.sflag [#allocation3], %s2136
        %s2138 = sand.u32 %s122, 1
        %s2139 = smul.addr %s2138, 2
        %s2140 = scalar_lea.vmem [#allocation2], %s2139
        %p2141 = scmp.lt.s32.totalorder %s20, 1
        %s2142 = scalar_select %p2141, %s20, 1
        %s2143 = smul.addr %s2142, 4
        %s2144 = scalar_lea.vmem %s5, %s2143
        // Predicated region
        $region37: #{exclusion_classifier_forward.1} parent=35 // pred_check
          %p2145 = pneg %p132
        $region38: #{exclusion_classifier_forward.1} parent=35 // pred_check_branch
          %2147 = sbr.rel (%p2145) target = $region40
        $region39: #{exclusion_classifier_forward.1} parent=35 // pred_region
          %s2149 = ssub.s32 32, 32
          %2150 = vsyncadd %s2137, %s2149
          %s2151 = smul.addr %s20, 32
          %s2152 = scalar_lea.hbm %s4, %s2151
          %s2154 = sshll.u32 %s2140, 4
          %s2155 = int_to_ptr.vmem [resolvable:$true] %s2154
          %2157 = dma.vmem_to_hbm [thread:$0]  %s2155, 32, %s2152, %s2137
        $region40: #{exclusion_classifier_forward.1} parent=35 // pred_fallthru
          _
        // Predicated region
        $region41: #{exclusion_classifier_forward.1} parent=35 // pred_check
          %p2158 = pneg %p158
        $region42: #{exclusion_classifier_forward.1} parent=35 // pred_check_branch
          %2160 = sbr.rel (%p2158) target = $region44
        $region43: #{exclusion_classifier_forward.1} parent=35 // pred_region
          _
        $region44: #{exclusion_classifier_forward.1} parent=35 // pred_fallthru
          _
      $region36: #{exclusion_classifier_forward.1} parent=5 // pred_fallthru
        _
      %p2161 = scmp.le.s32.totalorder 2, %s15
      // Predicated region
      $region45: #{exclusion_classifier_forward.1} parent=5 // pred_check
        %p2162 = pneg %p2161
      $region46: #{exclusion_classifier_forward.1} parent=5 // pred_check_branch
        %2164 = sbr.rel (%p2162) target = $region48
      $region47: #{exclusion_classifier_forward.1} parent=5 // pred_region
        %s2165 = ssub.s32 %s15, 2
        // Predicated region
        $region49: #{exclusion_classifier_forward.1} parent=47 // pred_check
          %p2166 = pneg %p138
        $region50: #{exclusion_classifier_forward.1} parent=47 // pred_check_branch
          %2168 = sbr.rel (%p2166) target = $region52
        $region51: #{exclusion_classifier_forward.1} parent=47 // pred_region
          %s2169 = sand.u32 %s123, 1
          %s2170 = scalar_lea.sflag [#allocation3], %s2169
          %s2171 = sand.u32 %s123, 1
          %s2172 = smul.addr %s2171, 2
          %s2173 = scalar_lea.vmem [#allocation2], %s2172
          %2174 = dma.done %s2170, 32
        $region52: #{exclusion_classifier_forward.1} parent=47 // pred_fallthru
          _
        // Predicated region
        $region53: #{exclusion_classifier_forward.1} parent=47 // pred_check
          %p2175 = pneg %p164
        $region54: #{exclusion_classifier_forward.1} parent=47 // pred_check_branch
          %2177 = sbr.rel (%p2175) target = $region56
        $region55: #{exclusion_classifier_forward.1} parent=47 // pred_region
          %p2178 = scmp.lt.s32.totalorder %s21, 1
          %s2179 = scalar_select %p2178, %s21, 1
          %s2180 = smul.addr %s2179, 4
          %s2181 = scalar_lea.vmem %s5, %s2180
        $region56: #{exclusion_classifier_forward.1} parent=47 // pred_fallthru
          _
      $region48: #{exclusion_classifier_forward.1} parent=5 // pred_fallthru
        _
    $region6: #{exclusion_classifier_forward.1} parent=1 // loop_footer
      %s19 = sadd.s32 1, %s15
    $region7: #{exclusion_classifier_forward.1} parent=1 // loop_footer_branch
      %14 = sbr.rel target = $region3
    $region8: #{exclusion_classifier_forward.1} parent=1 // loop_exit
      _
    %2182 = vsyncpa [#allocation3], 1
    %s2183 = scalar_lea.sflag [#allocation3], 1
    %2184 = vsyncpa %s2183, 1

</llo_original>
